<compile_context>
chip_gen: v6e
topology: v6e:2x2x1
jax: 0.10.0
libtpu: 0.0.40
codegen_flags: <defaults>
</compile_context>

<pallas_src>
import jax
import jax.numpy as jnp
from jax.experimental import pallas as pl
from jax.experimental.pallas import tpu as pltpu


def make_small_fourier_kernel(B, Cin, Cmid, Cout, H, W):
    KH = KW = 3

    def kernel(x_ref, w1_ref, scale_ref, shift_ref, w2_ref, b2_ref,
               out_ref, xp_ref):
        # x_ref:    (B, Cin, H, W)      whole-batch input tile, VMEM
        # w1_ref:   (Cmid*Cin*3*3,)     conv1 weights, SMEM, torch OIHW flat
        # scale_ref:(Cmid,)             folded BN scale, SMEM
        # shift_ref:(Cmid,)             folded BN shift (incl. conv1 bias), SMEM
        # w2_ref:   (Cout*Cmid,)        1x1 conv weights, SMEM
        # b2_ref:   (Cout,)             1x1 conv bias, SMEM
        # out_ref:  (B, Cout, H, W)
        # xp_ref:   (B, Cin, H+2, W+2)  VMEM scratch: zero-padded input

        # In-kernel "same" padding: zero the scratch, then copy the interior.
        xp_ref[...] = jnp.zeros_like(xp_ref)
        xp_ref[:, :, 1:H + 1, 1:W + 1] = x_ref[...]

        for b in range(B):
            # conv1 (3x3) as fully unrolled scalar-weight VPU MACs.
            # Each shifted window is extracted once and reused for all Cmid
            # output channels (18 window extractions instead of 72).
            acc = [None] * Cmid
            for ci in range(Cin):
                for dy in range(KH):
                    for dx in range(KW):
                        win = xp_ref[b, ci, dy:dy + H, dx:dx + W]
                        for cm in range(Cmid):
                            widx = ((cm * Cin + ci) * KH + dy) * KW + dx
                            term = w1_ref[widx] * win
                            acc[cm] = term if acc[cm] is None else acc[cm] + term

            # BatchNorm (folded, eval mode) + ReLU.
            hidden = [jnp.maximum(acc[cm] * scale_ref[cm] + shift_ref[cm], 0.0)
                      for cm in range(Cmid)]

            # conv_last: 1x1 conv = per-pixel channel mixing; bias + first term
            # seed the accumulator directly (no zeros pass).
            for co in range(Cout):
                acc2 = hidden[0] * w2_ref[co * Cmid] + b2_ref[co]
                for cm in range(1, Cmid):
                    acc2 = acc2 + w2_ref[co * Cmid + cm] * hidden[cm]
                out_ref[b, co, :, :] = acc2.astype(out_ref.dtype)

    return kernel


def small_fourier_forward(x, params):
    """x: (B, 2, H, W) float32 (NCHW).  Returns (B, 2, H*W)."""
    B, Cin, H, W = x.shape
    w1, b1, gamma, beta, rmean, rvar, w2, b2 = (
        params["w1"], params["b1"], params["gamma"], params["beta"],
        params["rmean"], params["rvar"], params["w2"], params["b2"],
    )
    Cmid = w1.shape[0]
    Cout = w2.shape[0]
    eps = 1e-5

    # Glue: fold conv1 bias + BN(eval) into per-channel scale/shift.
    scale = gamma / jnp.sqrt(rvar + eps)                 # (Cmid,)
    shift = scale * b1 + beta - rmean * scale            # (Cmid,)

    # Flatten weights for SMEM scalar access (torch OIHW order).
    w1_flat = w1.reshape(-1).astype(jnp.float32)          # (Cmid*Cin*9,)
    w2_flat = w2.reshape(-1).astype(jnp.float32)          # (Cout*Cmid,)

    kernel = make_small_fourier_kernel(B, Cin, Cmid, Cout, H, W)
    smem_spec = pl.BlockSpec(memory_space=pltpu.MemorySpace.SMEM)

    y = pl.pallas_call(
        kernel,
        out_shape=jax.ShapeDtypeStruct((B, Cout, H, W), jnp.float32),
        grid=(1,),  # single step: whole batch processed at once
        in_specs=[
            pl.BlockSpec((B, Cin, H, W), lambda i: (0, 0, 0, 0)),
            smem_spec,  # w1
            smem_spec,  # scale
            smem_spec,  # shift
            smem_spec,  # w2
            smem_spec,  # b2
        ],
        out_specs=pl.BlockSpec((B, Cout, H, W), lambda i: (0, 0, 0, 0)),
        scratch_shapes=[pltpu.VMEM((B, Cin, H + 2, W + 2), jnp.float32)],
    )(x.astype(jnp.float32), w1_flat, scale.astype(jnp.float32),
      shift.astype(jnp.float32), w2_flat, b2.astype(jnp.float32))

    # flatten_with_channel: (B, C, H, W) -> (B, C, H*W)
    return y.reshape(B, Cout, H * W)


def reference_forward(x, params):
    """Pure-JAX reference (matches PyTorch eval-mode semantics)."""
    w1, b1, gamma, beta, rmean, rvar, w2, b2 = (
        params["w1"], params["b1"], params["gamma"], params["beta"],
        params["rmean"], params["rvar"], params["w2"], params["b2"],
    )
    eps = 1e-5
    dn = ("NCHW", "OIHW", "NCHW")
    y = jax.lax.conv_general_dilated(x, w1, (1, 1), ((1, 1), (1, 1)),
                                     dimension_numbers=dn)
    y = y + b1[None, :, None, None]
    y = gamma[None, :, None, None] * (y - rmean[None, :, None, None]) \
        / jnp.sqrt(rvar[None, :, None, None] + eps) + beta[None, :, None, None]
    y = jnp.maximum(y, 0.0)
    z = jax.lax.conv_general_dilated(y, w2, (1, 1), ((0, 0), (0, 0)),
                                     dimension_numbers=dn)
    z = z + b2[None, :, None, None]
    return z.reshape(z.shape[0], z.shape[1], -1)


if __name__ == "__main__":
    B, Cin, Cmid, Cout, H, W = 2, 2, 4, 2, 16, 16

    key = jax.random.PRNGKey(0)
    ks = jax.random.split(key, 8)
    params = {
        # conv1: Conv2d(2, 4, 3x3)
        "w1": 0.1 * jax.random.normal(ks[0], (Cmid, Cin, 3, 3), jnp.float32),
        "b1": 0.1 * jax.random.normal(ks[1], (Cmid,), jnp.float32),
        # BatchNorm2d(4) — deterministic, non-trivial eval-mode stats
        "gamma": 1.0 + 0.1 * jax.random.normal(ks[2], (Cmid,), jnp.float32),
        "beta": 0.1 * jax.random.normal(ks[3], (Cmid,), jnp.float32),
        "rmean": 0.05 * jax.random.normal(ks[4], (Cmid,), jnp.float32),
        "rvar": 1.0 + 0.1 * jnp.abs(jax.random.normal(ks[5], (Cmid,), jnp.float32)),
        # conv_last: Conv2d(4, 2, 1x1)
        "w2": 0.1 * jax.random.normal(ks[6], (Cout, Cmid, 1, 1), jnp.float32),
        "b2": 0.1 * jax.random.normal(ks[7], (Cout,), jnp.float32),
    }

    x = jax.random.normal(jax.random.PRNGKey(42), (B, Cin, H, W), jnp.float32)

    out = small_fourier_forward(x, params)
    out = jax.block_until_ready(out)

    ref = jax.block_until_ready(reference_forward(x, params))

    assert out.shape == (B, Cout, H * W), out.shape
    err = float(jnp.max(jnp.abs(out - ref)))
    assert err < 1e-4, f"max abs error {err}"

    print("KERNEL_OK")
</pallas_src>

<mosaic_0001>
module attributes {stable_mosaic.version = 11 : i64} {
  func.func @kernel(%arg0: i32, %arg1: memref<2x2x16x16xf32, #tpu.memory_space<vmem>>, %arg2: memref<72xf32, #tpu.memory_space<smem>>, %arg3: memref<4xf32, #tpu.memory_space<smem>>, %arg4: memref<4xf32, #tpu.memory_space<smem>>, %arg5: memref<8xf32, #tpu.memory_space<smem>>, %arg6: memref<2xf32, #tpu.memory_space<smem>>, %arg7: memref<2x2x16x16xf32, #tpu.memory_space<vmem>>, %arg8: memref<2x2x18x18xf32, #tpu.memory_space<vmem>>) attributes {dimension_semantics = [#tpu.dimension_semantics<arbitrary>], iteration_bounds = array<i64: 1>, scalar_prefetch = 0 : i64, scratch_operands = 1 : i64, tpu.core_type = #tpu.core_type<tc>, window_params = [{pipeline_mode = #tpu.pipeline_mode<synchronous>, transform_indices = @transform_0, window_bounds = array<i64: 2, 2, 16, 16>}, {transform_indices = @transform_1, window_bounds = array<i64: 72>}, {transform_indices = @transform_2, window_bounds = array<i64: 4>}, {transform_indices = @transform_3, window_bounds = array<i64: 4>}, {transform_indices = @transform_4, window_bounds = array<i64: 8>}, {transform_indices = @transform_5, window_bounds = array<i64: 2>}, {pipeline_mode = #tpu.pipeline_mode<synchronous>, transform_indices = @transform_6, window_bounds = array<i64: 2, 2, 16, 16>}]} {
    %cst = arith.constant 0.000000e+00 : f32
    %0 = vector.broadcast %cst : f32 to vector<2x2x18x18xf32>
    %c0 = arith.constant 0 : index
    %c0_0 = arith.constant 0 : index
    %c0_1 = arith.constant 0 : index
    %c0_2 = arith.constant 0 : index
    %1 = vector.load %arg8[%c0, %c0_0, %c0_1, %c0_2] : memref<2x2x18x18xf32, #tpu.memory_space<vmem>>, vector<2x2x18x18xf32>
    tpu.vector_store %arg8[%c0, %c0_0, %c0_1, %c0_2], %0 {strides = array<i32>} : memref<2x2x18x18xf32, #tpu.memory_space<vmem>>, vector<2x2x18x18xf32>,
    %c0_3 = arith.constant 0 : index
    %c0_4 = arith.constant 0 : index
    %c0_5 = arith.constant 0 : index
    %c0_6 = arith.constant 0 : index
    %2 = vector.load %arg1[%c0_3, %c0_4, %c0_5, %c0_6] : memref<2x2x16x16xf32, #tpu.memory_space<vmem>>, vector<2x2x16x16xf32>
    %c0_7 = arith.constant 0 : index
    %c0_8 = arith.constant 0 : index
    %c1 = arith.constant 1 : index
    %c1_9 = arith.constant 1 : index
    %3 = vector.load %arg8[%c0_7, %c0_8, %c1, %c1_9] : memref<2x2x18x18xf32, #tpu.memory_space<vmem>>, vector<2x2x16x16xf32>
    tpu.vector_store %arg8[%c0_7, %c0_8, %c1, %c1_9], %2 {strides = array<i32>} : memref<2x2x18x18xf32, #tpu.memory_space<vmem>>, vector<2x2x16x16xf32>,
    %c0_10 = arith.constant 0 : index
    %c0_11 = arith.constant 0 : index
    %c0_12 = arith.constant 0 : index
    %c0_13 = arith.constant 0 : index
    %4 = vector.load %arg8[%c0_10, %c0_11, %c0_12, %c0_13] : memref<2x2x18x18xf32, #tpu.memory_space<vmem>>, vector<1x1x16x16xf32>
    %5 = vector.shape_cast %4 : vector<1x1x16x16xf32> to vector<16x16xf32>
    %c0_14 = arith.constant 0 : index
    %6 = memref.load %arg2[%c0_14] : memref<72xf32, #tpu.memory_space<smem>>
    %7 = vector.broadcast %6 : f32 to vector<16x16xf32>
    %8 = arith.mulf %7, %5 : vector<16x16xf32>
    %c18 = arith.constant 18 : index
    %9 = memref.load %arg2[%c18] : memref<72xf32, #tpu.memory_space<smem>>
    %10 = vector.broadcast %9 : f32 to vector<16x16xf32>
    %11 = arith.mulf %10, %5 : vector<16x16xf32>
    %c36 = arith.constant 36 : index
    %12 = memref.load %arg2[%c36] : memref<72xf32, #tpu.memory_space<smem>>
    %13 = vector.broadcast %12 : f32 to vector<16x16xf32>
    %14 = arith.mulf %13, %5 : vector<16x16xf32>
    %c54 = arith.constant 54 : index
    %15 = memref.load %arg2[%c54] : memref<72xf32, #tpu.memory_space<smem>>
    %16 = vector.broadcast %15 : f32 to vector<16x16xf32>
    %17 = arith.mulf %16, %5 : vector<16x16xf32>
    %c0_15 = arith.constant 0 : index
    %c0_16 = arith.constant 0 : index
    %c0_17 = arith.constant 0 : index
    %c1_18 = arith.constant 1 : index
    %18 = vector.load %arg8[%c0_15, %c0_16, %c0_17, %c1_18] : memref<2x2x18x18xf32, #tpu.memory_space<vmem>>, vector<1x1x16x16xf32>
    %19 = vector.shape_cast %18 : vector<1x1x16x16xf32> to vector<16x16xf32>
    %c1_19 = arith.constant 1 : index
    %20 = memref.load %arg2[%c1_19] : memref<72xf32, #tpu.memory_space<smem>>
    %21 = vector.broadcast %20 : f32 to vector<16x16xf32>
    %22 = arith.mulf %21, %19 : vector<16x16xf32>
    %23 = arith.addf %8, %22 : vector<16x16xf32>
    %c19 = arith.constant 19 : index
    %24 = memref.load %arg2[%c19] : memref<72xf32, #tpu.memory_space<smem>>
    %25 = vector.broadcast %24 : f32 to vector<16x16xf32>
    %26 = arith.mulf %25, %19 : vector<16x16xf32>
    %27 = arith.addf %11, %26 : vector<16x16xf32>
    %c37 = arith.constant 37 : index
    %28 = memref.load %arg2[%c37] : memref<72xf32, #tpu.memory_space<smem>>
    %29 = vector.broadcast %28 : f32 to vector<16x16xf32>
    %30 = arith.mulf %29, %19 : vector<16x16xf32>
    %31 = arith.addf %14, %30 : vector<16x16xf32>
    %c55 = arith.constant 55 : index
    %32 = memref.load %arg2[%c55] : memref<72xf32, #tpu.memory_space<smem>>
    %33 = vector.broadcast %32 : f32 to vector<16x16xf32>
    %34 = arith.mulf %33, %19 : vector<16x16xf32>
    %35 = arith.addf %17, %34 : vector<16x16xf32>
    %c0_20 = arith.constant 0 : index
    %c0_21 = arith.constant 0 : index
    %c0_22 = arith.constant 0 : index
    %c2 = arith.constant 2 : index
    %36 = vector.load %arg8[%c0_20, %c0_21, %c0_22, %c2] : memref<2x2x18x18xf32, #tpu.memory_space<vmem>>, vector<1x1x16x16xf32>
    %37 = vector.shape_cast %36 : vector<1x1x16x16xf32> to vector<16x16xf32>
    %c2_23 = arith.constant 2 : index
    %38 = memref.load %arg2[%c2_23] : memref<72xf32, #tpu.memory_space<smem>>
    %39 = vector.broadcast %38 : f32 to vector<16x16xf32>
    %40 = arith.mulf %39, %37 : vector<16x16xf32>
    %41 = arith.addf %23, %40 : vector<16x16xf32>
    %c20 = arith.constant 20 : index
    %42 = memref.load %arg2[%c20] : memref<72xf32, #tpu.memory_space<smem>>
    %43 = vector.broadcast %42 : f32 to vector<16x16xf32>
    %44 = arith.mulf %43, %37 : vector<16x16xf32>
    %45 = arith.addf %27, %44 : vector<16x16xf32>
    %c38 = arith.constant 38 : index
    %46 = memref.load %arg2[%c38] : memref<72xf32, #tpu.memory_space<smem>>
    %47 = vector.broadcast %46 : f32 to vector<16x16xf32>
    %48 = arith.mulf %47, %37 : vector<16x16xf32>
    %49 = arith.addf %31, %48 : vector<16x16xf32>
    %c56 = arith.constant 56 : index
    %50 = memref.load %arg2[%c56] : memref<72xf32, #tpu.memory_space<smem>>
    %51 = vector.broadcast %50 : f32 to vector<16x16xf32>
    %52 = arith.mulf %51, %37 : vector<16x16xf32>
    %53 = arith.addf %35, %52 : vector<16x16xf32>
    %c0_24 = arith.constant 0 : index
    %c0_25 = arith.constant 0 : index
    %c1_26 = arith.constant 1 : index
    %c0_27 = arith.constant 0 : index
    %54 = vector.load %arg8[%c0_24, %c0_25, %c1_26, %c0_27] : memref<2x2x18x18xf32, #tpu.memory_space<vmem>>, vector<1x1x16x16xf32>
    %55 = vector.shape_cast %54 : vector<1x1x16x16xf32> to vector<16x16xf32>
    %c3 = arith.constant 3 : index
    %56 = memref.load %arg2[%c3] : memref<72xf32, #tpu.memory_space<smem>>
    %57 = vector.broadcast %56 : f32 to vector<16x16xf32>
    %58 = arith.mulf %57, %55 : vector<16x16xf32>
    %59 = arith.addf %41, %58 : vector<16x16xf32>
    %c21 = arith.constant 21 : index
    %60 = memref.load %arg2[%c21] : memref<72xf32, #tpu.memory_space<smem>>
    %61 = vector.broadcast %60 : f32 to vector<16x16xf32>
    %62 = arith.mulf %61, %55 : vector<16x16xf32>
    %63 = arith.addf %45, %62 : vector<16x16xf32>
    %c39 = arith.constant 39 : index
    %64 = memref.load %arg2[%c39] : memref<72xf32, #tpu.memory_space<smem>>
    %65 = vector.broadcast %64 : f32 to vector<16x16xf32>
    %66 = arith.mulf %65, %55 : vector<16x16xf32>
    %67 = arith.addf %49, %66 : vector<16x16xf32>
    %c57 = arith.constant 57 : index
    %68 = memref.load %arg2[%c57] : memref<72xf32, #tpu.memory_space<smem>>
    %69 = vector.broadcast %68 : f32 to vector<16x16xf32>
    %70 = arith.mulf %69, %55 : vector<16x16xf32>
    %71 = arith.addf %53, %70 : vector<16x16xf32>
    %c0_28 = arith.constant 0 : index
    %c0_29 = arith.constant 0 : index
    %c1_30 = arith.constant 1 : index
    %c1_31 = arith.constant 1 : index
    %72 = vector.load %arg8[%c0_28, %c0_29, %c1_30, %c1_31] : memref<2x2x18x18xf32, #tpu.memory_space<vmem>>, vector<1x1x16x16xf32>
    %73 = vector.shape_cast %72 : vector<1x1x16x16xf32> to vector<16x16xf32>
    %c4 = arith.constant 4 : index
    %74 = memref.load %arg2[%c4] : memref<72xf32, #tpu.memory_space<smem>>
    %75 = vector.broadcast %74 : f32 to vector<16x16xf32>
    %76 = arith.mulf %75, %73 : vector<16x16xf32>
    %77 = arith.addf %59, %76 : vector<16x16xf32>
    %c22 = arith.constant 22 : index
    %78 = memref.load %arg2[%c22] : memref<72xf32, #tpu.memory_space<smem>>
    %79 = vector.broadcast %78 : f32 to vector<16x16xf32>
    %80 = arith.mulf %79, %73 : vector<16x16xf32>
    %81 = arith.addf %63, %80 : vector<16x16xf32>
    %c40 = arith.constant 40 : index
    %82 = memref.load %arg2[%c40] : memref<72xf32, #tpu.memory_space<smem>>
    %83 = vector.broadcast %82 : f32 to vector<16x16xf32>
    %84 = arith.mulf %83, %73 : vector<16x16xf32>
    %85 = arith.addf %67, %84 : vector<16x16xf32>
    %c58 = arith.constant 58 : index
    %86 = memref.load %arg2[%c58] : memref<72xf32, #tpu.memory_space<smem>>
    %87 = vector.broadcast %86 : f32 to vector<16x16xf32>
    %88 = arith.mulf %87, %73 : vector<16x16xf32>
    %89 = arith.addf %71, %88 : vector<16x16xf32>
    %c0_32 = arith.constant 0 : index
    %c0_33 = arith.constant 0 : index
    %c1_34 = arith.constant 1 : index
    %c2_35 = arith.constant 2 : index
    %90 = vector.load %arg8[%c0_32, %c0_33, %c1_34, %c2_35] : memref<2x2x18x18xf32, #tpu.memory_space<vmem>>, vector<1x1x16x16xf32>
    %91 = vector.shape_cast %90 : vector<1x1x16x16xf32> to vector<16x16xf32>
    %c5 = arith.constant 5 : index
    %92 = memref.load %arg2[%c5] : memref<72xf32, #tpu.memory_space<smem>>
    %93 = vector.broadcast %92 : f32 to vector<16x16xf32>
    %94 = arith.mulf %93, %91 : vector<16x16xf32>
    %95 = arith.addf %77, %94 : vector<16x16xf32>
    %c23 = arith.constant 23 : index
    %96 = memref.load %arg2[%c23] : memref<72xf32, #tpu.memory_space<smem>>
    %97 = vector.broadcast %96 : f32 to vector<16x16xf32>
    %98 = arith.mulf %97, %91 : vector<16x16xf32>
    %99 = arith.addf %81, %98 : vector<16x16xf32>
    %c41 = arith.constant 41 : index
    %100 = memref.load %arg2[%c41] : memref<72xf32, #tpu.memory_space<smem>>
    %101 = vector.broadcast %100 : f32 to vector<16x16xf32>
    %102 = arith.mulf %101, %91 : vector<16x16xf32>
    %103 = arith.addf %85, %102 : vector<16x16xf32>
    %c59 = arith.constant 59 : index
    %104 = memref.load %arg2[%c59] : memref<72xf32, #tpu.memory_space<smem>>
    %105 = vector.broadcast %104 : f32 to vector<16x16xf32>
    %106 = arith.mulf %105, %91 : vector<16x16xf32>
    %107 = arith.addf %89, %106 : vector<16x16xf32>
    %c0_36 = arith.constant 0 : index
    %c0_37 = arith.constant 0 : index
    %c2_38 = arith.constant 2 : index
    %c0_39 = arith.constant 0 : index
    %108 = vector.load %arg8[%c0_36, %c0_37, %c2_38, %c0_39] : memref<2x2x18x18xf32, #tpu.memory_space<vmem>>, vector<1x1x16x16xf32>
    %109 = vector.shape_cast %108 : vector<1x1x16x16xf32> to vector<16x16xf32>
    %c6 = arith.constant 6 : index
    %110 = memref.load %arg2[%c6] : memref<72xf32, #tpu.memory_space<smem>>
    %111 = vector.broadcast %110 : f32 to vector<16x16xf32>
    %112 = arith.mulf %111, %109 : vector<16x16xf32>
    %113 = arith.addf %95, %112 : vector<16x16xf32>
    %c24 = arith.constant 24 : index
    %114 = memref.load %arg2[%c24] : memref<72xf32, #tpu.memory_space<smem>>
    %115 = vector.broadcast %114 : f32 to vector<16x16xf32>
    %116 = arith.mulf %115, %109 : vector<16x16xf32>
    %117 = arith.addf %99, %116 : vector<16x16xf32>
    %c42 = arith.constant 42 : index
    %118 = memref.load %arg2[%c42] : memref<72xf32, #tpu.memory_space<smem>>
    %119 = vector.broadcast %118 : f32 to vector<16x16xf32>
    %120 = arith.mulf %119, %109 : vector<16x16xf32>
    %121 = arith.addf %103, %120 : vector<16x16xf32>
    %c60 = arith.constant 60 : index
    %122 = memref.load %arg2[%c60] : memref<72xf32, #tpu.memory_space<smem>>
    %123 = vector.broadcast %122 : f32 to vector<16x16xf32>
    %124 = arith.mulf %123, %109 : vector<16x16xf32>
    %125 = arith.addf %107, %124 : vector<16x16xf32>
    %c0_40 = arith.constant 0 : index
    %c0_41 = arith.constant 0 : index
    %c2_42 = arith.constant 2 : index
    %c1_43 = arith.constant 1 : index
    %126 = vector.load %arg8[%c0_40, %c0_41, %c2_42, %c1_43] : memref<2x2x18x18xf32, #tpu.memory_space<vmem>>, vector<1x1x16x16xf32>
    %127 = vector.shape_cast %126 : vector<1x1x16x16xf32> to vector<16x16xf32>
    %c7 = arith.constant 7 : index
    %128 = memref.load %arg2[%c7] : memref<72xf32, #tpu.memory_space<smem>>
    %129 = vector.broadcast %128 : f32 to vector<16x16xf32>
    %130 = arith.mulf %129, %127 : vector<16x16xf32>
    %131 = arith.addf %113, %130 : vector<16x16xf32>
    %c25 = arith.constant 25 : index
    %132 = memref.load %arg2[%c25] : memref<72xf32, #tpu.memory_space<smem>>
    %133 = vector.broadcast %132 : f32 to vector<16x16xf32>
    %134 = arith.mulf %133, %127 : vector<16x16xf32>
    %135 = arith.addf %117, %134 : vector<16x16xf32>
    %c43 = arith.constant 43 : index
    %136 = memref.load %arg2[%c43] : memref<72xf32, #tpu.memory_space<smem>>
    %137 = vector.broadcast %136 : f32 to vector<16x16xf32>
    %138 = arith.mulf %137, %127 : vector<16x16xf32>
    %139 = arith.addf %121, %138 : vector<16x16xf32>
    %c61 = arith.constant 61 : index
    %140 = memref.load %arg2[%c61] : memref<72xf32, #tpu.memory_space<smem>>
    %141 = vector.broadcast %140 : f32 to vector<16x16xf32>
    %142 = arith.mulf %141, %127 : vector<16x16xf32>
    %143 = arith.addf %125, %142 : vector<16x16xf32>
    %c0_44 = arith.constant 0 : index
    %c0_45 = arith.constant 0 : index
    %c2_46 = arith.constant 2 : index
    %c2_47 = arith.constant 2 : index
    %144 = vector.load %arg8[%c0_44, %c0_45, %c2_46, %c2_47] : memref<2x2x18x18xf32, #tpu.memory_space<vmem>>, vector<1x1x16x16xf32>
    %145 = vector.shape_cast %144 : vector<1x1x16x16xf32> to vector<16x16xf32>
    %c8 = arith.constant 8 : index
    %146 = memref.load %arg2[%c8] : memref<72xf32, #tpu.memory_space<smem>>
    %147 = vector.broadcast %146 : f32 to vector<16x16xf32>
    %148 = arith.mulf %147, %145 : vector<16x16xf32>
    %149 = arith.addf %131, %148 : vector<16x16xf32>
    %c26 = arith.constant 26 : index
    %150 = memref.load %arg2[%c26] : memref<72xf32, #tpu.memory_space<smem>>
    %151 = vector.broadcast %150 : f32 to vector<16x16xf32>
    %152 = arith.mulf %151, %145 : vector<16x16xf32>
    %153 = arith.addf %135, %152 : vector<16x16xf32>
    %c44 = arith.constant 44 : index
    %154 = memref.load %arg2[%c44] : memref<72xf32, #tpu.memory_space<smem>>
    %155 = vector.broadcast %154 : f32 to vector<16x16xf32>
    %156 = arith.mulf %155, %145 : vector<16x16xf32>
    %157 = arith.addf %139, %156 : vector<16x16xf32>
    %c62 = arith.constant 62 : index
    %158 = memref.load %arg2[%c62] : memref<72xf32, #tpu.memory_space<smem>>
    %159 = vector.broadcast %158 : f32 to vector<16x16xf32>
    %160 = arith.mulf %159, %145 : vector<16x16xf32>
    %161 = arith.addf %143, %160 : vector<16x16xf32>
    %c0_48 = arith.constant 0 : index
    %c1_49 = arith.constant 1 : index
    %c0_50 = arith.constant 0 : index
    %c0_51 = arith.constant 0 : index
    %162 = vector.load %arg8[%c0_48, %c1_49, %c0_50, %c0_51] : memref<2x2x18x18xf32, #tpu.memory_space<vmem>>, vector<1x1x16x16xf32>
    %163 = vector.shape_cast %162 : vector<1x1x16x16xf32> to vector<16x16xf32>
    %c9 = arith.constant 9 : index
    %164 = memref.load %arg2[%c9] : memref<72xf32, #tpu.memory_space<smem>>
    %165 = vector.broadcast %164 : f32 to vector<16x16xf32>
    %166 = arith.mulf %165, %163 : vector<16x16xf32>
    %167 = arith.addf %149, %166 : vector<16x16xf32>
    %c27 = arith.constant 27 : index
    %168 = memref.load %arg2[%c27] : memref<72xf32, #tpu.memory_space<smem>>
    %169 = vector.broadcast %168 : f32 to vector<16x16xf32>
    %170 = arith.mulf %169, %163 : vector<16x16xf32>
    %171 = arith.addf %153, %170 : vector<16x16xf32>
    %c45 = arith.constant 45 : index
    %172 = memref.load %arg2[%c45] : memref<72xf32, #tpu.memory_space<smem>>
    %173 = vector.broadcast %172 : f32 to vector<16x16xf32>
    %174 = arith.mulf %173, %163 : vector<16x16xf32>
    %175 = arith.addf %157, %174 : vector<16x16xf32>
    %c63 = arith.constant 63 : index
    %176 = memref.load %arg2[%c63] : memref<72xf32, #tpu.memory_space<smem>>
    %177 = vector.broadcast %176 : f32 to vector<16x16xf32>
    %178 = arith.mulf %177, %163 : vector<16x16xf32>
    %179 = arith.addf %161, %178 : vector<16x16xf32>
    %c0_52 = arith.constant 0 : index
    %c1_53 = arith.constant 1 : index
    %c0_54 = arith.constant 0 : index
    %c1_55 = arith.constant 1 : index
    %180 = vector.load %arg8[%c0_52, %c1_53, %c0_54, %c1_55] : memref<2x2x18x18xf32, #tpu.memory_space<vmem>>, vector<1x1x16x16xf32>
    %181 = vector.shape_cast %180 : vector<1x1x16x16xf32> to vector<16x16xf32>
    %c10 = arith.constant 10 : index
    %182 = memref.load %arg2[%c10] : memref<72xf32, #tpu.memory_space<smem>>
    %183 = vector.broadcast %182 : f32 to vector<16x16xf32>
    %184 = arith.mulf %183, %181 : vector<16x16xf32>
    %185 = arith.addf %167, %184 : vector<16x16xf32>
    %c28 = arith.constant 28 : index
    %186 = memref.load %arg2[%c28] : memref<72xf32, #tpu.memory_space<smem>>
    %187 = vector.broadcast %186 : f32 to vector<16x16xf32>
    %188 = arith.mulf %187, %181 : vector<16x16xf32>
    %189 = arith.addf %171, %188 : vector<16x16xf32>
    %c46 = arith.constant 46 : index
    %190 = memref.load %arg2[%c46] : memref<72xf32, #tpu.memory_space<smem>>
    %191 = vector.broadcast %190 : f32 to vector<16x16xf32>
    %192 = arith.mulf %191, %181 : vector<16x16xf32>
    %193 = arith.addf %175, %192 : vector<16x16xf32>
    %c64 = arith.constant 64 : index
    %194 = memref.load %arg2[%c64] : memref<72xf32, #tpu.memory_space<smem>>
    %195 = vector.broadcast %194 : f32 to vector<16x16xf32>
    %196 = arith.mulf %195, %181 : vector<16x16xf32>
    %197 = arith.addf %179, %196 : vector<16x16xf32>
    %c0_56 = arith.constant 0 : index
    %c1_57 = arith.constant 1 : index
    %c0_58 = arith.constant 0 : index
    %c2_59 = arith.constant 2 : index
    %198 = vector.load %arg8[%c0_56, %c1_57, %c0_58, %c2_59] : memref<2x2x18x18xf32, #tpu.memory_space<vmem>>, vector<1x1x16x16xf32>
    %199 = vector.shape_cast %198 : vector<1x1x16x16xf32> to vector<16x16xf32>
    %c11 = arith.constant 11 : index
    %200 = memref.load %arg2[%c11] : memref<72xf32, #tpu.memory_space<smem>>
    %201 = vector.broadcast %200 : f32 to vector<16x16xf32>
    %202 = arith.mulf %201, %199 : vector<16x16xf32>
    %203 = arith.addf %185, %202 : vector<16x16xf32>
    %c29 = arith.constant 29 : index
    %204 = memref.load %arg2[%c29] : memref<72xf32, #tpu.memory_space<smem>>
    %205 = vector.broadcast %204 : f32 to vector<16x16xf32>
    %206 = arith.mulf %205, %199 : vector<16x16xf32>
    %207 = arith.addf %189, %206 : vector<16x16xf32>
    %c47 = arith.constant 47 : index
    %208 = memref.load %arg2[%c47] : memref<72xf32, #tpu.memory_space<smem>>
    %209 = vector.broadcast %208 : f32 to vector<16x16xf32>
    %210 = arith.mulf %209, %199 : vector<16x16xf32>
    %211 = arith.addf %193, %210 : vector<16x16xf32>
    %c65 = arith.constant 65 : index
    %212 = memref.load %arg2[%c65] : memref<72xf32, #tpu.memory_space<smem>>
    %213 = vector.broadcast %212 : f32 to vector<16x16xf32>
    %214 = arith.mulf %213, %199 : vector<16x16xf32>
    %215 = arith.addf %197, %214 : vector<16x16xf32>
    %c0_60 = arith.constant 0 : index
    %c1_61 = arith.constant 1 : index
    %c1_62 = arith.constant 1 : index
    %c0_63 = arith.constant 0 : index
    %216 = vector.load %arg8[%c0_60, %c1_61, %c1_62, %c0_63] : memref<2x2x18x18xf32, #tpu.memory_space<vmem>>, vector<1x1x16x16xf32>
    %217 = vector.shape_cast %216 : vector<1x1x16x16xf32> to vector<16x16xf32>
    %c12 = arith.constant 12 : index
    %218 = memref.load %arg2[%c12] : memref<72xf32, #tpu.memory_space<smem>>
    %219 = vector.broadcast %218 : f32 to vector<16x16xf32>
    %220 = arith.mulf %219, %217 : vector<16x16xf32>
    %221 = arith.addf %203, %220 : vector<16x16xf32>
    %c30 = arith.constant 30 : index
    %222 = memref.load %arg2[%c30] : memref<72xf32, #tpu.memory_space<smem>>
    %223 = vector.broadcast %222 : f32 to vector<16x16xf32>
    %224 = arith.mulf %223, %217 : vector<16x16xf32>
    %225 = arith.addf %207, %224 : vector<16x16xf32>
    %c48 = arith.constant 48 : index
    %226 = memref.load %arg2[%c48] : memref<72xf32, #tpu.memory_space<smem>>
    %227 = vector.broadcast %226 : f32 to vector<16x16xf32>
    %228 = arith.mulf %227, %217 : vector<16x16xf32>
    %229 = arith.addf %211, %228 : vector<16x16xf32>
    %c66 = arith.constant 66 : index
    %230 = memref.load %arg2[%c66] : memref<72xf32, #tpu.memory_space<smem>>
    %231 = vector.broadcast %230 : f32 to vector<16x16xf32>
    %232 = arith.mulf %231, %217 : vector<16x16xf32>
    %233 = arith.addf %215, %232 : vector<16x16xf32>
    %c0_64 = arith.constant 0 : index
    %c1_65 = arith.constant 1 : index
    %c1_66 = arith.constant 1 : index
    %c1_67 = arith.constant 1 : index
    %234 = vector.load %arg8[%c0_64, %c1_65, %c1_66, %c1_67] : memref<2x2x18x18xf32, #tpu.memory_space<vmem>>, vector<1x1x16x16xf32>
    %235 = vector.shape_cast %234 : vector<1x1x16x16xf32> to vector<16x16xf32>
    %c13 = arith.constant 13 : index
    %236 = memref.load %arg2[%c13] : memref<72xf32, #tpu.memory_space<smem>>
    %237 = vector.broadcast %236 : f32 to vector<16x16xf32>
    %238 = arith.mulf %237, %235 : vector<16x16xf32>
    %239 = arith.addf %221, %238 : vector<16x16xf32>
    %c31 = arith.constant 31 : index
    %240 = memref.load %arg2[%c31] : memref<72xf32, #tpu.memory_space<smem>>
    %241 = vector.broadcast %240 : f32 to vector<16x16xf32>
    %242 = arith.mulf %241, %235 : vector<16x16xf32>
    %243 = arith.addf %225, %242 : vector<16x16xf32>
    %c49 = arith.constant 49 : index
    %244 = memref.load %arg2[%c49] : memref<72xf32, #tpu.memory_space<smem>>
    %245 = vector.broadcast %244 : f32 to vector<16x16xf32>
    %246 = arith.mulf %245, %235 : vector<16x16xf32>
    %247 = arith.addf %229, %246 : vector<16x16xf32>
    %c67 = arith.constant 67 : index
    %248 = memref.load %arg2[%c67] : memref<72xf32, #tpu.memory_space<smem>>
    %249 = vector.broadcast %248 : f32 to vector<16x16xf32>
    %250 = arith.mulf %249, %235 : vector<16x16xf32>
    %251 = arith.addf %233, %250 : vector<16x16xf32>
    %c0_68 = arith.constant 0 : index
    %c1_69 = arith.constant 1 : index
    %c1_70 = arith.constant 1 : index
    %c2_71 = arith.constant 2 : index
    %252 = vector.load %arg8[%c0_68, %c1_69, %c1_70, %c2_71] : memref<2x2x18x18xf32, #tpu.memory_space<vmem>>, vector<1x1x16x16xf32>
    %253 = vector.shape_cast %252 : vector<1x1x16x16xf32> to vector<16x16xf32>
    %c14 = arith.constant 14 : index
    %254 = memref.load %arg2[%c14] : memref<72xf32, #tpu.memory_space<smem>>
    %255 = vector.broadcast %254 : f32 to vector<16x16xf32>
    %256 = arith.mulf %255, %253 : vector<16x16xf32>
    %257 = arith.addf %239, %256 : vector<16x16xf32>
    %c32 = arith.constant 32 : index
    %258 = memref.load %arg2[%c32] : memref<72xf32, #tpu.memory_space<smem>>
    %259 = vector.broadcast %258 : f32 to vector<16x16xf32>
    %260 = arith.mulf %259, %253 : vector<16x16xf32>
    %261 = arith.addf %243, %260 : vector<16x16xf32>
    %c50 = arith.constant 50 : index
    %262 = memref.load %arg2[%c50] : memref<72xf32, #tpu.memory_space<smem>>
    %263 = vector.broadcast %262 : f32 to vector<16x16xf32>
    %264 = arith.mulf %263, %253 : vector<16x16xf32>
    %265 = arith.addf %247, %264 : vector<16x16xf32>
    %c68 = arith.constant 68 : index
    %266 = memref.load %arg2[%c68] : memref<72xf32, #tpu.memory_space<smem>>
    %267 = vector.broadcast %266 : f32 to vector<16x16xf32>
    %268 = arith.mulf %267, %253 : vector<16x16xf32>
    %269 = arith.addf %251, %268 : vector<16x16xf32>
    %c0_72 = arith.constant 0 : index
    %c1_73 = arith.constant 1 : index
    %c2_74 = arith.constant 2 : index
    %c0_75 = arith.constant 0 : index
    %270 = vector.load %arg8[%c0_72, %c1_73, %c2_74, %c0_75] : memref<2x2x18x18xf32, #tpu.memory_space<vmem>>, vector<1x1x16x16xf32>
    %271 = vector.shape_cast %270 : vector<1x1x16x16xf32> to vector<16x16xf32>
    %c15 = arith.constant 15 : index
    %272 = memref.load %arg2[%c15] : memref<72xf32, #tpu.memory_space<smem>>
    %273 = vector.broadcast %272 : f32 to vector<16x16xf32>
    %274 = arith.mulf %273, %271 : vector<16x16xf32>
    %275 = arith.addf %257, %274 : vector<16x16xf32>
    %c33 = arith.constant 33 : index
    %276 = memref.load %arg2[%c33] : memref<72xf32, #tpu.memory_space<smem>>
    %277 = vector.broadcast %276 : f32 to vector<16x16xf32>
    %278 = arith.mulf %277, %271 : vector<16x16xf32>
    %279 = arith.addf %261, %278 : vector<16x16xf32>
    %c51 = arith.constant 51 : index
    %280 = memref.load %arg2[%c51] : memref<72xf32, #tpu.memory_space<smem>>
    %281 = vector.broadcast %280 : f32 to vector<16x16xf32>
    %282 = arith.mulf %281, %271 : vector<16x16xf32>
    %283 = arith.addf %265, %282 : vector<16x16xf32>
    %c69 = arith.constant 69 : index
    %284 = memref.load %arg2[%c69] : memref<72xf32, #tpu.memory_space<smem>>
    %285 = vector.broadcast %284 : f32 to vector<16x16xf32>
    %286 = arith.mulf %285, %271 : vector<16x16xf32>
    %287 = arith.addf %269, %286 : vector<16x16xf32>
    %c0_76 = arith.constant 0 : index
    %c1_77 = arith.constant 1 : index
    %c2_78 = arith.constant 2 : index
    %c1_79 = arith.constant 1 : index
    %288 = vector.load %arg8[%c0_76, %c1_77, %c2_78, %c1_79] : memref<2x2x18x18xf32, #tpu.memory_space<vmem>>, vector<1x1x16x16xf32>
    %289 = vector.shape_cast %288 : vector<1x1x16x16xf32> to vector<16x16xf32>
    %c16 = arith.constant 16 : index
    %290 = memref.load %arg2[%c16] : memref<72xf32, #tpu.memory_space<smem>>
    %291 = vector.broadcast %290 : f32 to vector<16x16xf32>
    %292 = arith.mulf %291, %289 : vector<16x16xf32>
    %293 = arith.addf %275, %292 : vector<16x16xf32>
    %c34 = arith.constant 34 : index
    %294 = memref.load %arg2[%c34] : memref<72xf32, #tpu.memory_space<smem>>
    %295 = vector.broadcast %294 : f32 to vector<16x16xf32>
    %296 = arith.mulf %295, %289 : vector<16x16xf32>
    %297 = arith.addf %279, %296 : vector<16x16xf32>
    %c52 = arith.constant 52 : index
    %298 = memref.load %arg2[%c52] : memref<72xf32, #tpu.memory_space<smem>>
    %299 = vector.broadcast %298 : f32 to vector<16x16xf32>
    %300 = arith.mulf %299, %289 : vector<16x16xf32>
    %301 = arith.addf %283, %300 : vector<16x16xf32>
    %c70 = arith.constant 70 : index
    %302 = memref.load %arg2[%c70] : memref<72xf32, #tpu.memory_space<smem>>
    %303 = vector.broadcast %302 : f32 to vector<16x16xf32>
    %304 = arith.mulf %303, %289 : vector<16x16xf32>
    %305 = arith.addf %287, %304 : vector<16x16xf32>
    %c0_80 = arith.constant 0 : index
    %c1_81 = arith.constant 1 : index
    %c2_82 = arith.constant 2 : index
    %c2_83 = arith.constant 2 : index
    %306 = vector.load %arg8[%c0_80, %c1_81, %c2_82, %c2_83] : memref<2x2x18x18xf32, #tpu.memory_space<vmem>>, vector<1x1x16x16xf32>
    %307 = vector.shape_cast %306 : vector<1x1x16x16xf32> to vector<16x16xf32>
    %c17 = arith.constant 17 : index
    %308 = memref.load %arg2[%c17] : memref<72xf32, #tpu.memory_space<smem>>
    %309 = vector.broadcast %308 : f32 to vector<16x16xf32>
    %310 = arith.mulf %309, %307 : vector<16x16xf32>
    %311 = arith.addf %293, %310 : vector<16x16xf32>
    %c35 = arith.constant 35 : index
    %312 = memref.load %arg2[%c35] : memref<72xf32, #tpu.memory_space<smem>>
    %313 = vector.broadcast %312 : f32 to vector<16x16xf32>
    %314 = arith.mulf %313, %307 : vector<16x16xf32>
    %315 = arith.addf %297, %314 : vector<16x16xf32>
    %c53 = arith.constant 53 : index
    %316 = memref.load %arg2[%c53] : memref<72xf32, #tpu.memory_space<smem>>
    %317 = vector.broadcast %316 : f32 to vector<16x16xf32>
    %318 = arith.mulf %317, %307 : vector<16x16xf32>
    %319 = arith.addf %301, %318 : vector<16x16xf32>
    %c71 = arith.constant 71 : index
    %320 = memref.load %arg2[%c71] : memref<72xf32, #tpu.memory_space<smem>>
    %321 = vector.broadcast %320 : f32 to vector<16x16xf32>
    %322 = arith.mulf %321, %307 : vector<16x16xf32>
    %323 = arith.addf %305, %322 : vector<16x16xf32>
    %c0_84 = arith.constant 0 : index
    %324 = memref.load %arg3[%c0_84] : memref<4xf32, #tpu.memory_space<smem>>
    %325 = vector.broadcast %324 : f32 to vector<16x16xf32>
    %326 = arith.mulf %311, %325 : vector<16x16xf32>
    %c0_85 = arith.constant 0 : index
    %327 = memref.load %arg4[%c0_85] : memref<4xf32, #tpu.memory_space<smem>>
    %328 = vector.broadcast %327 : f32 to vector<16x16xf32>
    %329 = arith.addf %326, %328 : vector<16x16xf32>
    %cst_86 = arith.constant 0.000000e+00 : f32
    %330 = vector.broadcast %cst_86 : f32 to vector<16x16xf32>
    %331 = arith.maximumf %329, %330 : vector<16x16xf32>
    %c1_87 = arith.constant 1 : index
    %332 = memref.load %arg3[%c1_87] : memref<4xf32, #tpu.memory_space<smem>>
    %333 = vector.broadcast %332 : f32 to vector<16x16xf32>
    %334 = arith.mulf %315, %333 : vector<16x16xf32>
    %c1_88 = arith.constant 1 : index
    %335 = memref.load %arg4[%c1_88] : memref<4xf32, #tpu.memory_space<smem>>
    %336 = vector.broadcast %335 : f32 to vector<16x16xf32>
    %337 = arith.addf %334, %336 : vector<16x16xf32>
    %cst_89 = arith.constant 0.000000e+00 : f32
    %338 = vector.broadcast %cst_89 : f32 to vector<16x16xf32>
    %339 = arith.maximumf %337, %338 : vector<16x16xf32>
    %c2_90 = arith.constant 2 : index
    %340 = memref.load %arg3[%c2_90] : memref<4xf32, #tpu.memory_space<smem>>
    %341 = vector.broadcast %340 : f32 to vector<16x16xf32>
    %342 = arith.mulf %319, %341 : vector<16x16xf32>
    %c2_91 = arith.constant 2 : index
    %343 = memref.load %arg4[%c2_91] : memref<4xf32, #tpu.memory_space<smem>>
    %344 = vector.broadcast %343 : f32 to vector<16x16xf32>
    %345 = arith.addf %342, %344 : vector<16x16xf32>
    %cst_92 = arith.constant 0.000000e+00 : f32
    %346 = vector.broadcast %cst_92 : f32 to vector<16x16xf32>
    %347 = arith.maximumf %345, %346 : vector<16x16xf32>
    %c3_93 = arith.constant 3 : index
    %348 = memref.load %arg3[%c3_93] : memref<4xf32, #tpu.memory_space<smem>>
    %349 = vector.broadcast %348 : f32 to vector<16x16xf32>
    %350 = arith.mulf %323, %349 : vector<16x16xf32>
    %c3_94 = arith.constant 3 : index
    %351 = memref.load %arg4[%c3_94] : memref<4xf32, #tpu.memory_space<smem>>
    %352 = vector.broadcast %351 : f32 to vector<16x16xf32>
    %353 = arith.addf %350, %352 : vector<16x16xf32>
    %cst_95 = arith.constant 0.000000e+00 : f32
    %354 = vector.broadcast %cst_95 : f32 to vector<16x16xf32>
    %355 = arith.maximumf %353, %354 : vector<16x16xf32>
    %c0_96 = arith.constant 0 : index
    %356 = memref.load %arg5[%c0_96] : memref<8xf32, #tpu.memory_space<smem>>
    %357 = vector.broadcast %356 : f32 to vector<16x16xf32>
    %358 = arith.mulf %331, %357 : vector<16x16xf32>
    %c0_97 = arith.constant 0 : index
    %359 = memref.load %arg6[%c0_97] : memref<2xf32, #tpu.memory_space<smem>>
    %360 = vector.broadcast %359 : f32 to vector<16x16xf32>
    %361 = arith.addf %358, %360 : vector<16x16xf32>
    %c1_98 = arith.constant 1 : index
    %362 = memref.load %arg5[%c1_98] : memref<8xf32, #tpu.memory_space<smem>>
    %363 = vector.broadcast %362 : f32 to vector<16x16xf32>
    %364 = arith.mulf %363, %339 : vector<16x16xf32>
    %365 = arith.addf %361, %364 : vector<16x16xf32>
    %c2_99 = arith.constant 2 : index
    %366 = memref.load %arg5[%c2_99] : memref<8xf32, #tpu.memory_space<smem>>
    %367 = vector.broadcast %366 : f32 to vector<16x16xf32>
    %368 = arith.mulf %367, %347 : vector<16x16xf32>
    %369 = arith.addf %365, %368 : vector<16x16xf32>
    %c3_100 = arith.constant 3 : index
    %370 = memref.load %arg5[%c3_100] : memref<8xf32, #tpu.memory_space<smem>>
    %371 = vector.broadcast %370 : f32 to vector<16x16xf32>
    %372 = arith.mulf %371, %355 : vector<16x16xf32>
    %373 = arith.addf %369, %372 : vector<16x16xf32>
    %c0_101 = arith.constant 0 : index
    %c0_102 = arith.constant 0 : index
    %c0_103 = arith.constant 0 : index
    %c0_104 = arith.constant 0 : index
    %374 = vector.load %arg7[%c0_101, %c0_102, %c0_103, %c0_104] : memref<2x2x16x16xf32, #tpu.memory_space<vmem>>, vector<1x1x16x16xf32>
    %375 = vector.shape_cast %374 : vector<1x1x16x16xf32> to vector<16x16xf32>
    %376 = vector.shape_cast %373 : vector<16x16xf32> to vector<1x1x16x16xf32>
    tpu.vector_store %arg7[%c0_101, %c0_102, %c0_103, %c0_104], %376 {strides = array<i32>} : memref<2x2x16x16xf32, #tpu.memory_space<vmem>>, vector<1x1x16x16xf32>,
    %c4_105 = arith.constant 4 : index
    %377 = memref.load %arg5[%c4_105] : memref<8xf32, #tpu.memory_space<smem>>
    %378 = vector.broadcast %377 : f32 to vector<16x16xf32>
    %379 = arith.mulf %331, %378 : vector<16x16xf32>
    %c1_106 = arith.constant 1 : index
    %380 = memref.load %arg6[%c1_106] : memref<2xf32, #tpu.memory_space<smem>>
    %381 = vector.broadcast %380 : f32 to vector<16x16xf32>
    %382 = arith.addf %379, %381 : vector<16x16xf32>
    %c5_107 = arith.constant 5 : index
    %383 = memref.load %arg5[%c5_107] : memref<8xf32, #tpu.memory_space<smem>>
    %384 = vector.broadcast %383 : f32 to vector<16x16xf32>
    %385 = arith.mulf %384, %339 : vector<16x16xf32>
    %386 = arith.addf %382, %385 : vector<16x16xf32>
    %c6_108 = arith.constant 6 : index
    %387 = memref.load %arg5[%c6_108] : memref<8xf32, #tpu.memory_space<smem>>
    %388 = vector.broadcast %387 : f32 to vector<16x16xf32>
    %389 = arith.mulf %388, %347 : vector<16x16xf32>
    %390 = arith.addf %386, %389 : vector<16x16xf32>
    %c7_109 = arith.constant 7 : index
    %391 = memref.load %arg5[%c7_109] : memref<8xf32, #tpu.memory_space<smem>>
    %392 = vector.broadcast %391 : f32 to vector<16x16xf32>
    %393 = arith.mulf %392, %355 : vector<16x16xf32>
    %394 = arith.addf %390, %393 : vector<16x16xf32>
    %c0_110 = arith.constant 0 : index
    %c1_111 = arith.constant 1 : index
    %c0_112 = arith.constant 0 : index
    %c0_113 = arith.constant 0 : index
    %395 = vector.load %arg7[%c0_110, %c1_111, %c0_112, %c0_113] : memref<2x2x16x16xf32, #tpu.memory_space<vmem>>, vector<1x1x16x16xf32>
    %396 = vector.shape_cast %395 : vector<1x1x16x16xf32> to vector<16x16xf32>
    %397 = vector.shape_cast %394 : vector<16x16xf32> to vector<1x1x16x16xf32>
    tpu.vector_store %arg7[%c0_110, %c1_111, %c0_112, %c0_113], %397 {strides = array<i32>} : memref<2x2x16x16xf32, #tpu.memory_space<vmem>>, vector<1x1x16x16xf32>,
    %c1_114 = arith.constant 1 : index
    %c0_115 = arith.constant 0 : index
    %c0_116 = arith.constant 0 : index
    %c0_117 = arith.constant 0 : index
    %398 = vector.load %arg8[%c1_114, %c0_115, %c0_116, %c0_117] : memref<2x2x18x18xf32, #tpu.memory_space<vmem>>, vector<1x1x16x16xf32>
    %399 = vector.shape_cast %398 : vector<1x1x16x16xf32> to vector<16x16xf32>
    %c0_118 = arith.constant 0 : index
    %400 = memref.load %arg2[%c0_118] : memref<72xf32, #tpu.memory_space<smem>>
    %401 = vector.broadcast %400 : f32 to vector<16x16xf32>
    %402 = arith.mulf %401, %399 : vector<16x16xf32>
    %c18_119 = arith.constant 18 : index
    %403 = memref.load %arg2[%c18_119] : memref<72xf32, #tpu.memory_space<smem>>
    %404 = vector.broadcast %403 : f32 to vector<16x16xf32>
    %405 = arith.mulf %404, %399 : vector<16x16xf32>
    %c36_120 = arith.constant 36 : index
    %406 = memref.load %arg2[%c36_120] : memref<72xf32, #tpu.memory_space<smem>>
    %407 = vector.broadcast %406 : f32 to vector<16x16xf32>
    %408 = arith.mulf %407, %399 : vector<16x16xf32>
    %c54_121 = arith.constant 54 : index
    %409 = memref.load %arg2[%c54_121] : memref<72xf32, #tpu.memory_space<smem>>
    %410 = vector.broadcast %409 : f32 to vector<16x16xf32>
    %411 = arith.mulf %410, %399 : vector<16x16xf32>
    %c1_122 = arith.constant 1 : index
    %c0_123 = arith.constant 0 : index
    %c0_124 = arith.constant 0 : index
    %c1_125 = arith.constant 1 : index
    %412 = vector.load %arg8[%c1_122, %c0_123, %c0_124, %c1_125] : memref<2x2x18x18xf32, #tpu.memory_space<vmem>>, vector<1x1x16x16xf32>
    %413 = vector.shape_cast %412 : vector<1x1x16x16xf32> to vector<16x16xf32>
    %c1_126 = arith.constant 1 : index
    %414 = memref.load %arg2[%c1_126] : memref<72xf32, #tpu.memory_space<smem>>
    %415 = vector.broadcast %414 : f32 to vector<16x16xf32>
    %416 = arith.mulf %415, %413 : vector<16x16xf32>
    %417 = arith.addf %402, %416 : vector<16x16xf32>
    %c19_127 = arith.constant 19 : index
    %418 = memref.load %arg2[%c19_127] : memref<72xf32, #tpu.memory_space<smem>>
    %419 = vector.broadcast %418 : f32 to vector<16x16xf32>
    %420 = arith.mulf %419, %413 : vector<16x16xf32>
    %421 = arith.addf %405, %420 : vector<16x16xf32>
    %c37_128 = arith.constant 37 : index
    %422 = memref.load %arg2[%c37_128] : memref<72xf32, #tpu.memory_space<smem>>
    %423 = vector.broadcast %422 : f32 to vector<16x16xf32>
    %424 = arith.mulf %423, %413 : vector<16x16xf32>
    %425 = arith.addf %408, %424 : vector<16x16xf32>
    %c55_129 = arith.constant 55 : index
    %426 = memref.load %arg2[%c55_129] : memref<72xf32, #tpu.memory_space<smem>>
    %427 = vector.broadcast %426 : f32 to vector<16x16xf32>
    %428 = arith.mulf %427, %413 : vector<16x16xf32>
    %429 = arith.addf %411, %428 : vector<16x16xf32>
    %c1_130 = arith.constant 1 : index
    %c0_131 = arith.constant 0 : index
    %c0_132 = arith.constant 0 : index
    %c2_133 = arith.constant 2 : index
    %430 = vector.load %arg8[%c1_130, %c0_131, %c0_132, %c2_133] : memref<2x2x18x18xf32, #tpu.memory_space<vmem>>, vector<1x1x16x16xf32>
    %431 = vector.shape_cast %430 : vector<1x1x16x16xf32> to vector<16x16xf32>
    %c2_134 = arith.constant 2 : index
    %432 = memref.load %arg2[%c2_134] : memref<72xf32, #tpu.memory_space<smem>>
    %433 = vector.broadcast %432 : f32 to vector<16x16xf32>
    %434 = arith.mulf %433, %431 : vector<16x16xf32>
    %435 = arith.addf %417, %434 : vector<16x16xf32>
    %c20_135 = arith.constant 20 : index
    %436 = memref.load %arg2[%c20_135] : memref<72xf32, #tpu.memory_space<smem>>
    %437 = vector.broadcast %436 : f32 to vector<16x16xf32>
    %438 = arith.mulf %437, %431 : vector<16x16xf32>
    %439 = arith.addf %421, %438 : vector<16x16xf32>
    %c38_136 = arith.constant 38 : index
    %440 = memref.load %arg2[%c38_136] : memref<72xf32, #tpu.memory_space<smem>>
    %441 = vector.broadcast %440 : f32 to vector<16x16xf32>
    %442 = arith.mulf %441, %431 : vector<16x16xf32>
    %443 = arith.addf %425, %442 : vector<16x16xf32>
    %c56_137 = arith.constant 56 : index
    %444 = memref.load %arg2[%c56_137] : memref<72xf32, #tpu.memory_space<smem>>
    %445 = vector.broadcast %444 : f32 to vector<16x16xf32>
    %446 = arith.mulf %445, %431 : vector<16x16xf32>
    %447 = arith.addf %429, %446 : vector<16x16xf32>
    %c1_138 = arith.constant 1 : index
    %c0_139 = arith.constant 0 : index
    %c1_140 = arith.constant 1 : index
    %c0_141 = arith.constant 0 : index
    %448 = vector.load %arg8[%c1_138, %c0_139, %c1_140, %c0_141] : memref<2x2x18x18xf32, #tpu.memory_space<vmem>>, vector<1x1x16x16xf32>
    %449 = vector.shape_cast %448 : vector<1x1x16x16xf32> to vector<16x16xf32>
    %c3_142 = arith.constant 3 : index
    %450 = memref.load %arg2[%c3_142] : memref<72xf32, #tpu.memory_space<smem>>
    %451 = vector.broadcast %450 : f32 to vector<16x16xf32>
    %452 = arith.mulf %451, %449 : vector<16x16xf32>
    %453 = arith.addf %435, %452 : vector<16x16xf32>
    %c21_143 = arith.constant 21 : index
    %454 = memref.load %arg2[%c21_143] : memref<72xf32, #tpu.memory_space<smem>>
    %455 = vector.broadcast %454 : f32 to vector<16x16xf32>
    %456 = arith.mulf %455, %449 : vector<16x16xf32>
    %457 = arith.addf %439, %456 : vector<16x16xf32>
    %c39_144 = arith.constant 39 : index
    %458 = memref.load %arg2[%c39_144] : memref<72xf32, #tpu.memory_space<smem>>
    %459 = vector.broadcast %458 : f32 to vector<16x16xf32>
    %460 = arith.mulf %459, %449 : vector<16x16xf32>
    %461 = arith.addf %443, %460 : vector<16x16xf32>
    %c57_145 = arith.constant 57 : index
    %462 = memref.load %arg2[%c57_145] : memref<72xf32, #tpu.memory_space<smem>>
    %463 = vector.broadcast %462 : f32 to vector<16x16xf32>
    %464 = arith.mulf %463, %449 : vector<16x16xf32>
    %465 = arith.addf %447, %464 : vector<16x16xf32>
    %c1_146 = arith.constant 1 : index
    %c0_147 = arith.constant 0 : index
    %c1_148 = arith.constant 1 : index
    %c1_149 = arith.constant 1 : index
    %466 = vector.load %arg8[%c1_146, %c0_147, %c1_148, %c1_149] : memref<2x2x18x18xf32, #tpu.memory_space<vmem>>, vector<1x1x16x16xf32>
    %467 = vector.shape_cast %466 : vector<1x1x16x16xf32> to vector<16x16xf32>
    %c4_150 = arith.constant 4 : index
    %468 = memref.load %arg2[%c4_150] : memref<72xf32, #tpu.memory_space<smem>>
    %469 = vector.broadcast %468 : f32 to vector<16x16xf32>
    %470 = arith.mulf %469, %467 : vector<16x16xf32>
    %471 = arith.addf %453, %470 : vector<16x16xf32>
    %c22_151 = arith.constant 22 : index
    %472 = memref.load %arg2[%c22_151] : memref<72xf32, #tpu.memory_space<smem>>
    %473 = vector.broadcast %472 : f32 to vector<16x16xf32>
    %474 = arith.mulf %473, %467 : vector<16x16xf32>
    %475 = arith.addf %457, %474 : vector<16x16xf32>
    %c40_152 = arith.constant 40 : index
    %476 = memref.load %arg2[%c40_152] : memref<72xf32, #tpu.memory_space<smem>>
    %477 = vector.broadcast %476 : f32 to vector<16x16xf32>
    %478 = arith.mulf %477, %467 : vector<16x16xf32>
    %479 = arith.addf %461, %478 : vector<16x16xf32>
    %c58_153 = arith.constant 58 : index
    %480 = memref.load %arg2[%c58_153] : memref<72xf32, #tpu.memory_space<smem>>
    %481 = vector.broadcast %480 : f32 to vector<16x16xf32>
    %482 = arith.mulf %481, %467 : vector<16x16xf32>
    %483 = arith.addf %465, %482 : vector<16x16xf32>
    %c1_154 = arith.constant 1 : index
    %c0_155 = arith.constant 0 : index
    %c1_156 = arith.constant 1 : index
    %c2_157 = arith.constant 2 : index
    %484 = vector.load %arg8[%c1_154, %c0_155, %c1_156, %c2_157] : memref<2x2x18x18xf32, #tpu.memory_space<vmem>>, vector<1x1x16x16xf32>
    %485 = vector.shape_cast %484 : vector<1x1x16x16xf32> to vector<16x16xf32>
    %c5_158 = arith.constant 5 : index
    %486 = memref.load %arg2[%c5_158] : memref<72xf32, #tpu.memory_space<smem>>
    %487 = vector.broadcast %486 : f32 to vector<16x16xf32>
    %488 = arith.mulf %487, %485 : vector<16x16xf32>
    %489 = arith.addf %471, %488 : vector<16x16xf32>
    %c23_159 = arith.constant 23 : index
    %490 = memref.load %arg2[%c23_159] : memref<72xf32, #tpu.memory_space<smem>>
    %491 = vector.broadcast %490 : f32 to vector<16x16xf32>
    %492 = arith.mulf %491, %485 : vector<16x16xf32>
    %493 = arith.addf %475, %492 : vector<16x16xf32>
    %c41_160 = arith.constant 41 : index
    %494 = memref.load %arg2[%c41_160] : memref<72xf32, #tpu.memory_space<smem>>
    %495 = vector.broadcast %494 : f32 to vector<16x16xf32>
    %496 = arith.mulf %495, %485 : vector<16x16xf32>
    %497 = arith.addf %479, %496 : vector<16x16xf32>
    %c59_161 = arith.constant 59 : index
    %498 = memref.load %arg2[%c59_161] : memref<72xf32, #tpu.memory_space<smem>>
    %499 = vector.broadcast %498 : f32 to vector<16x16xf32>
    %500 = arith.mulf %499, %485 : vector<16x16xf32>
    %501 = arith.addf %483, %500 : vector<16x16xf32>
    %c1_162 = arith.constant 1 : index
    %c0_163 = arith.constant 0 : index
    %c2_164 = arith.constant 2 : index
    %c0_165 = arith.constant 0 : index
    %502 = vector.load %arg8[%c1_162, %c0_163, %c2_164, %c0_165] : memref<2x2x18x18xf32, #tpu.memory_space<vmem>>, vector<1x1x16x16xf32>
    %503 = vector.shape_cast %502 : vector<1x1x16x16xf32> to vector<16x16xf32>
    %c6_166 = arith.constant 6 : index
    %504 = memref.load %arg2[%c6_166] : memref<72xf32, #tpu.memory_space<smem>>
    %505 = vector.broadcast %504 : f32 to vector<16x16xf32>
    %506 = arith.mulf %505, %503 : vector<16x16xf32>
    %507 = arith.addf %489, %506 : vector<16x16xf32>
    %c24_167 = arith.constant 24 : index
    %508 = memref.load %arg2[%c24_167] : memref<72xf32, #tpu.memory_space<smem>>
    %509 = vector.broadcast %508 : f32 to vector<16x16xf32>
    %510 = arith.mulf %509, %503 : vector<16x16xf32>
    %511 = arith.addf %493, %510 : vector<16x16xf32>
    %c42_168 = arith.constant 42 : index
    %512 = memref.load %arg2[%c42_168] : memref<72xf32, #tpu.memory_space<smem>>
    %513 = vector.broadcast %512 : f32 to vector<16x16xf32>
    %514 = arith.mulf %513, %503 : vector<16x16xf32>
    %515 = arith.addf %497, %514 : vector<16x16xf32>
    %c60_169 = arith.constant 60 : index
    %516 = memref.load %arg2[%c60_169] : memref<72xf32, #tpu.memory_space<smem>>
    %517 = vector.broadcast %516 : f32 to vector<16x16xf32>
    %518 = arith.mulf %517, %503 : vector<16x16xf32>
    %519 = arith.addf %501, %518 : vector<16x16xf32>
    %c1_170 = arith.constant 1 : index
    %c0_171 = arith.constant 0 : index
    %c2_172 = arith.constant 2 : index
    %c1_173 = arith.constant 1 : index
    %520 = vector.load %arg8[%c1_170, %c0_171, %c2_172, %c1_173] : memref<2x2x18x18xf32, #tpu.memory_space<vmem>>, vector<1x1x16x16xf32>
    %521 = vector.shape_cast %520 : vector<1x1x16x16xf32> to vector<16x16xf32>
    %c7_174 = arith.constant 7 : index
    %522 = memref.load %arg2[%c7_174] : memref<72xf32, #tpu.memory_space<smem>>
    %523 = vector.broadcast %522 : f32 to vector<16x16xf32>
    %524 = arith.mulf %523, %521 : vector<16x16xf32>
    %525 = arith.addf %507, %524 : vector<16x16xf32>
    %c25_175 = arith.constant 25 : index
    %526 = memref.load %arg2[%c25_175] : memref<72xf32, #tpu.memory_space<smem>>
    %527 = vector.broadcast %526 : f32 to vector<16x16xf32>
    %528 = arith.mulf %527, %521 : vector<16x16xf32>
    %529 = arith.addf %511, %528 : vector<16x16xf32>
    %c43_176 = arith.constant 43 : index
    %530 = memref.load %arg2[%c43_176] : memref<72xf32, #tpu.memory_space<smem>>
    %531 = vector.broadcast %530 : f32 to vector<16x16xf32>
    %532 = arith.mulf %531, %521 : vector<16x16xf32>
    %533 = arith.addf %515, %532 : vector<16x16xf32>
    %c61_177 = arith.constant 61 : index
    %534 = memref.load %arg2[%c61_177] : memref<72xf32, #tpu.memory_space<smem>>
    %535 = vector.broadcast %534 : f32 to vector<16x16xf32>
    %536 = arith.mulf %535, %521 : vector<16x16xf32>
    %537 = arith.addf %519, %536 : vector<16x16xf32>
    %c1_178 = arith.constant 1 : index
    %c0_179 = arith.constant 0 : index
    %c2_180 = arith.constant 2 : index
    %c2_181 = arith.constant 2 : index
    %538 = vector.load %arg8[%c1_178, %c0_179, %c2_180, %c2_181] : memref<2x2x18x18xf32, #tpu.memory_space<vmem>>, vector<1x1x16x16xf32>
    %539 = vector.shape_cast %538 : vector<1x1x16x16xf32> to vector<16x16xf32>
    %c8_182 = arith.constant 8 : index
    %540 = memref.load %arg2[%c8_182] : memref<72xf32, #tpu.memory_space<smem>>
    %541 = vector.broadcast %540 : f32 to vector<16x16xf32>
    %542 = arith.mulf %541, %539 : vector<16x16xf32>
    %543 = arith.addf %525, %542 : vector<16x16xf32>
    %c26_183 = arith.constant 26 : index
    %544 = memref.load %arg2[%c26_183] : memref<72xf32, #tpu.memory_space<smem>>
    %545 = vector.broadcast %544 : f32 to vector<16x16xf32>
    %546 = arith.mulf %545, %539 : vector<16x16xf32>
    %547 = arith.addf %529, %546 : vector<16x16xf32>
    %c44_184 = arith.constant 44 : index
    %548 = memref.load %arg2[%c44_184] : memref<72xf32, #tpu.memory_space<smem>>
    %549 = vector.broadcast %548 : f32 to vector<16x16xf32>
    %550 = arith.mulf %549, %539 : vector<16x16xf32>
    %551 = arith.addf %533, %550 : vector<16x16xf32>
    %c62_185 = arith.constant 62 : index
    %552 = memref.load %arg2[%c62_185] : memref<72xf32, #tpu.memory_space<smem>>
    %553 = vector.broadcast %552 : f32 to vector<16x16xf32>
    %554 = arith.mulf %553, %539 : vector<16x16xf32>
    %555 = arith.addf %537, %554 : vector<16x16xf32>
    %c1_186 = arith.constant 1 : index
    %c1_187 = arith.constant 1 : index
    %c0_188 = arith.constant 0 : index
    %c0_189 = arith.constant 0 : index
    %556 = vector.load %arg8[%c1_186, %c1_187, %c0_188, %c0_189] : memref<2x2x18x18xf32, #tpu.memory_space<vmem>>, vector<1x1x16x16xf32>
    %557 = vector.shape_cast %556 : vector<1x1x16x16xf32> to vector<16x16xf32>
    %c9_190 = arith.constant 9 : index
    %558 = memref.load %arg2[%c9_190] : memref<72xf32, #tpu.memory_space<smem>>
    %559 = vector.broadcast %558 : f32 to vector<16x16xf32>
    %560 = arith.mulf %559, %557 : vector<16x16xf32>
    %561 = arith.addf %543, %560 : vector<16x16xf32>
    %c27_191 = arith.constant 27 : index
    %562 = memref.load %arg2[%c27_191] : memref<72xf32, #tpu.memory_space<smem>>
    %563 = vector.broadcast %562 : f32 to vector<16x16xf32>
    %564 = arith.mulf %563, %557 : vector<16x16xf32>
    %565 = arith.addf %547, %564 : vector<16x16xf32>
    %c45_192 = arith.constant 45 : index
    %566 = memref.load %arg2[%c45_192] : memref<72xf32, #tpu.memory_space<smem>>
    %567 = vector.broadcast %566 : f32 to vector<16x16xf32>
    %568 = arith.mulf %567, %557 : vector<16x16xf32>
    %569 = arith.addf %551, %568 : vector<16x16xf32>
    %c63_193 = arith.constant 63 : index
    %570 = memref.load %arg2[%c63_193] : memref<72xf32, #tpu.memory_space<smem>>
    %571 = vector.broadcast %570 : f32 to vector<16x16xf32>
    %572 = arith.mulf %571, %557 : vector<16x16xf32>
    %573 = arith.addf %555, %572 : vector<16x16xf32>
    %c1_194 = arith.constant 1 : index
    %c1_195 = arith.constant 1 : index
    %c0_196 = arith.constant 0 : index
    %c1_197 = arith.constant 1 : index
    %574 = vector.load %arg8[%c1_194, %c1_195, %c0_196, %c1_197] : memref<2x2x18x18xf32, #tpu.memory_space<vmem>>, vector<1x1x16x16xf32>
    %575 = vector.shape_cast %574 : vector<1x1x16x16xf32> to vector<16x16xf32>
    %c10_198 = arith.constant 10 : index
    %576 = memref.load %arg2[%c10_198] : memref<72xf32, #tpu.memory_space<smem>>
    %577 = vector.broadcast %576 : f32 to vector<16x16xf32>
    %578 = arith.mulf %577, %575 : vector<16x16xf32>
    %579 = arith.addf %561, %578 : vector<16x16xf32>
    %c28_199 = arith.constant 28 : index
    %580 = memref.load %arg2[%c28_199] : memref<72xf32, #tpu.memory_space<smem>>
    %581 = vector.broadcast %580 : f32 to vector<16x16xf32>
    %582 = arith.mulf %581, %575 : vector<16x16xf32>
    %583 = arith.addf %565, %582 : vector<16x16xf32>
    %c46_200 = arith.constant 46 : index
    %584 = memref.load %arg2[%c46_200] : memref<72xf32, #tpu.memory_space<smem>>
    %585 = vector.broadcast %584 : f32 to vector<16x16xf32>
    %586 = arith.mulf %585, %575 : vector<16x16xf32>
    %587 = arith.addf %569, %586 : vector<16x16xf32>
    %c64_201 = arith.constant 64 : index
    %588 = memref.load %arg2[%c64_201] : memref<72xf32, #tpu.memory_space<smem>>
    %589 = vector.broadcast %588 : f32 to vector<16x16xf32>
    %590 = arith.mulf %589, %575 : vector<16x16xf32>
    %591 = arith.addf %573, %590 : vector<16x16xf32>
    %c1_202 = arith.constant 1 : index
    %c1_203 = arith.constant 1 : index
    %c0_204 = arith.constant 0 : index
    %c2_205 = arith.constant 2 : index
    %592 = vector.load %arg8[%c1_202, %c1_203, %c0_204, %c2_205] : memref<2x2x18x18xf32, #tpu.memory_space<vmem>>, vector<1x1x16x16xf32>
    %593 = vector.shape_cast %592 : vector<1x1x16x16xf32> to vector<16x16xf32>
    %c11_206 = arith.constant 11 : index
    %594 = memref.load %arg2[%c11_206] : memref<72xf32, #tpu.memory_space<smem>>
    %595 = vector.broadcast %594 : f32 to vector<16x16xf32>
    %596 = arith.mulf %595, %593 : vector<16x16xf32>
    %597 = arith.addf %579, %596 : vector<16x16xf32>
    %c29_207 = arith.constant 29 : index
    %598 = memref.load %arg2[%c29_207] : memref<72xf32, #tpu.memory_space<smem>>
    %599 = vector.broadcast %598 : f32 to vector<16x16xf32>
    %600 = arith.mulf %599, %593 : vector<16x16xf32>
    %601 = arith.addf %583, %600 : vector<16x16xf32>
    %c47_208 = arith.constant 47 : index
    %602 = memref.load %arg2[%c47_208] : memref<72xf32, #tpu.memory_space<smem>>
    %603 = vector.broadcast %602 : f32 to vector<16x16xf32>
    %604 = arith.mulf %603, %593 : vector<16x16xf32>
    %605 = arith.addf %587, %604 : vector<16x16xf32>
    %c65_209 = arith.constant 65 : index
    %606 = memref.load %arg2[%c65_209] : memref<72xf32, #tpu.memory_space<smem>>
    %607 = vector.broadcast %606 : f32 to vector<16x16xf32>
    %608 = arith.mulf %607, %593 : vector<16x16xf32>
    %609 = arith.addf %591, %608 : vector<16x16xf32>
    %c1_210 = arith.constant 1 : index
    %c1_211 = arith.constant 1 : index
    %c1_212 = arith.constant 1 : index
    %c0_213 = arith.constant 0 : index
    %610 = vector.load %arg8[%c1_210, %c1_211, %c1_212, %c0_213] : memref<2x2x18x18xf32, #tpu.memory_space<vmem>>, vector<1x1x16x16xf32>
    %611 = vector.shape_cast %610 : vector<1x1x16x16xf32> to vector<16x16xf32>
    %c12_214 = arith.constant 12 : index
    %612 = memref.load %arg2[%c12_214] : memref<72xf32, #tpu.memory_space<smem>>
    %613 = vector.broadcast %612 : f32 to vector<16x16xf32>
    %614 = arith.mulf %613, %611 : vector<16x16xf32>
    %615 = arith.addf %597, %614 : vector<16x16xf32>
    %c30_215 = arith.constant 30 : index
    %616 = memref.load %arg2[%c30_215] : memref<72xf32, #tpu.memory_space<smem>>
    %617 = vector.broadcast %616 : f32 to vector<16x16xf32>
    %618 = arith.mulf %617, %611 : vector<16x16xf32>
    %619 = arith.addf %601, %618 : vector<16x16xf32>
    %c48_216 = arith.constant 48 : index
    %620 = memref.load %arg2[%c48_216] : memref<72xf32, #tpu.memory_space<smem>>
    %621 = vector.broadcast %620 : f32 to vector<16x16xf32>
    %622 = arith.mulf %621, %611 : vector<16x16xf32>
    %623 = arith.addf %605, %622 : vector<16x16xf32>
    %c66_217 = arith.constant 66 : index
    %624 = memref.load %arg2[%c66_217] : memref<72xf32, #tpu.memory_space<smem>>
    %625 = vector.broadcast %624 : f32 to vector<16x16xf32>
    %626 = arith.mulf %625, %611 : vector<16x16xf32>
    %627 = arith.addf %609, %626 : vector<16x16xf32>
    %c1_218 = arith.constant 1 : index
    %c1_219 = arith.constant 1 : index
    %c1_220 = arith.constant 1 : index
    %c1_221 = arith.constant 1 : index
    %628 = vector.load %arg8[%c1_218, %c1_219, %c1_220, %c1_221] : memref<2x2x18x18xf32, #tpu.memory_space<vmem>>, vector<1x1x16x16xf32>
    %629 = vector.shape_cast %628 : vector<1x1x16x16xf32> to vector<16x16xf32>
    %c13_222 = arith.constant 13 : index
    %630 = memref.load %arg2[%c13_222] : memref<72xf32, #tpu.memory_space<smem>>
    %631 = vector.broadcast %630 : f32 to vector<16x16xf32>
    %632 = arith.mulf %631, %629 : vector<16x16xf32>
    %633 = arith.addf %615, %632 : vector<16x16xf32>
    %c31_223 = arith.constant 31 : index
    %634 = memref.load %arg2[%c31_223] : memref<72xf32, #tpu.memory_space<smem>>
    %635 = vector.broadcast %634 : f32 to vector<16x16xf32>
    %636 = arith.mulf %635, %629 : vector<16x16xf32>
    %637 = arith.addf %619, %636 : vector<16x16xf32>
    %c49_224 = arith.constant 49 : index
    %638 = memref.load %arg2[%c49_224] : memref<72xf32, #tpu.memory_space<smem>>
    %639 = vector.broadcast %638 : f32 to vector<16x16xf32>
    %640 = arith.mulf %639, %629 : vector<16x16xf32>
    %641 = arith.addf %623, %640 : vector<16x16xf32>
    %c67_225 = arith.constant 67 : index
    %642 = memref.load %arg2[%c67_225] : memref<72xf32, #tpu.memory_space<smem>>
    %643 = vector.broadcast %642 : f32 to vector<16x16xf32>
    %644 = arith.mulf %643, %629 : vector<16x16xf32>
    %645 = arith.addf %627, %644 : vector<16x16xf32>
    %c1_226 = arith.constant 1 : index
    %c1_227 = arith.constant 1 : index
    %c1_228 = arith.constant 1 : index
    %c2_229 = arith.constant 2 : index
    %646 = vector.load %arg8[%c1_226, %c1_227, %c1_228, %c2_229] : memref<2x2x18x18xf32, #tpu.memory_space<vmem>>, vector<1x1x16x16xf32>
    %647 = vector.shape_cast %646 : vector<1x1x16x16xf32> to vector<16x16xf32>
    %c14_230 = arith.constant 14 : index
    %648 = memref.load %arg2[%c14_230] : memref<72xf32, #tpu.memory_space<smem>>
    %649 = vector.broadcast %648 : f32 to vector<16x16xf32>
    %650 = arith.mulf %649, %647 : vector<16x16xf32>
    %651 = arith.addf %633, %650 : vector<16x16xf32>
    %c32_231 = arith.constant 32 : index
    %652 = memref.load %arg2[%c32_231] : memref<72xf32, #tpu.memory_space<smem>>
    %653 = vector.broadcast %652 : f32 to vector<16x16xf32>
    %654 = arith.mulf %653, %647 : vector<16x16xf32>
    %655 = arith.addf %637, %654 : vector<16x16xf32>
    %c50_232 = arith.constant 50 : index
    %656 = memref.load %arg2[%c50_232] : memref<72xf32, #tpu.memory_space<smem>>
    %657 = vector.broadcast %656 : f32 to vector<16x16xf32>
    %658 = arith.mulf %657, %647 : vector<16x16xf32>
    %659 = arith.addf %641, %658 : vector<16x16xf32>
    %c68_233 = arith.constant 68 : index
    %660 = memref.load %arg2[%c68_233] : memref<72xf32, #tpu.memory_space<smem>>
    %661 = vector.broadcast %660 : f32 to vector<16x16xf32>
    %662 = arith.mulf %661, %647 : vector<16x16xf32>
    %663 = arith.addf %645, %662 : vector<16x16xf32>
    %c1_234 = arith.constant 1 : index
    %c1_235 = arith.constant 1 : index
    %c2_236 = arith.constant 2 : index
    %c0_237 = arith.constant 0 : index
    %664 = vector.load %arg8[%c1_234, %c1_235, %c2_236, %c0_237] : memref<2x2x18x18xf32, #tpu.memory_space<vmem>>, vector<1x1x16x16xf32>
    %665 = vector.shape_cast %664 : vector<1x1x16x16xf32> to vector<16x16xf32>
    %c15_238 = arith.constant 15 : index
    %666 = memref.load %arg2[%c15_238] : memref<72xf32, #tpu.memory_space<smem>>
    %667 = vector.broadcast %666 : f32 to vector<16x16xf32>
    %668 = arith.mulf %667, %665 : vector<16x16xf32>
    %669 = arith.addf %651, %668 : vector<16x16xf32>
    %c33_239 = arith.constant 33 : index
    %670 = memref.load %arg2[%c33_239] : memref<72xf32, #tpu.memory_space<smem>>
    %671 = vector.broadcast %670 : f32 to vector<16x16xf32>
    %672 = arith.mulf %671, %665 : vector<16x16xf32>
    %673 = arith.addf %655, %672 : vector<16x16xf32>
    %c51_240 = arith.constant 51 : index
    %674 = memref.load %arg2[%c51_240] : memref<72xf32, #tpu.memory_space<smem>>
    %675 = vector.broadcast %674 : f32 to vector<16x16xf32>
    %676 = arith.mulf %675, %665 : vector<16x16xf32>
    %677 = arith.addf %659, %676 : vector<16x16xf32>
    %c69_241 = arith.constant 69 : index
    %678 = memref.load %arg2[%c69_241] : memref<72xf32, #tpu.memory_space<smem>>
    %679 = vector.broadcast %678 : f32 to vector<16x16xf32>
    %680 = arith.mulf %679, %665 : vector<16x16xf32>
    %681 = arith.addf %663, %680 : vector<16x16xf32>
    %c1_242 = arith.constant 1 : index
    %c1_243 = arith.constant 1 : index
    %c2_244 = arith.constant 2 : index
    %c1_245 = arith.constant 1 : index
    %682 = vector.load %arg8[%c1_242, %c1_243, %c2_244, %c1_245] : memref<2x2x18x18xf32, #tpu.memory_space<vmem>>, vector<1x1x16x16xf32>
    %683 = vector.shape_cast %682 : vector<1x1x16x16xf32> to vector<16x16xf32>
    %c16_246 = arith.constant 16 : index
    %684 = memref.load %arg2[%c16_246] : memref<72xf32, #tpu.memory_space<smem>>
    %685 = vector.broadcast %684 : f32 to vector<16x16xf32>
    %686 = arith.mulf %685, %683 : vector<16x16xf32>
    %687 = arith.addf %669, %686 : vector<16x16xf32>
    %c34_247 = arith.constant 34 : index
    %688 = memref.load %arg2[%c34_247] : memref<72xf32, #tpu.memory_space<smem>>
    %689 = vector.broadcast %688 : f32 to vector<16x16xf32>
    %690 = arith.mulf %689, %683 : vector<16x16xf32>
    %691 = arith.addf %673, %690 : vector<16x16xf32>
    %c52_248 = arith.constant 52 : index
    %692 = memref.load %arg2[%c52_248] : memref<72xf32, #tpu.memory_space<smem>>
    %693 = vector.broadcast %692 : f32 to vector<16x16xf32>
    %694 = arith.mulf %693, %683 : vector<16x16xf32>
    %695 = arith.addf %677, %694 : vector<16x16xf32>
    %c70_249 = arith.constant 70 : index
    %696 = memref.load %arg2[%c70_249] : memref<72xf32, #tpu.memory_space<smem>>
    %697 = vector.broadcast %696 : f32 to vector<16x16xf32>
    %698 = arith.mulf %697, %683 : vector<16x16xf32>
    %699 = arith.addf %681, %698 : vector<16x16xf32>
    %c1_250 = arith.constant 1 : index
    %c1_251 = arith.constant 1 : index
    %c2_252 = arith.constant 2 : index
    %c2_253 = arith.constant 2 : index
    %700 = vector.load %arg8[%c1_250, %c1_251, %c2_252, %c2_253] : memref<2x2x18x18xf32, #tpu.memory_space<vmem>>, vector<1x1x16x16xf32>
    %701 = vector.shape_cast %700 : vector<1x1x16x16xf32> to vector<16x16xf32>
    %c17_254 = arith.constant 17 : index
    %702 = memref.load %arg2[%c17_254] : memref<72xf32, #tpu.memory_space<smem>>
    %703 = vector.broadcast %702 : f32 to vector<16x16xf32>
    %704 = arith.mulf %703, %701 : vector<16x16xf32>
    %705 = arith.addf %687, %704 : vector<16x16xf32>
    %c35_255 = arith.constant 35 : index
    %706 = memref.load %arg2[%c35_255] : memref<72xf32, #tpu.memory_space<smem>>
    %707 = vector.broadcast %706 : f32 to vector<16x16xf32>
    %708 = arith.mulf %707, %701 : vector<16x16xf32>
    %709 = arith.addf %691, %708 : vector<16x16xf32>
    %c53_256 = arith.constant 53 : index
    %710 = memref.load %arg2[%c53_256] : memref<72xf32, #tpu.memory_space<smem>>
    %711 = vector.broadcast %710 : f32 to vector<16x16xf32>
    %712 = arith.mulf %711, %701 : vector<16x16xf32>
    %713 = arith.addf %695, %712 : vector<16x16xf32>
    %c71_257 = arith.constant 71 : index
    %714 = memref.load %arg2[%c71_257] : memref<72xf32, #tpu.memory_space<smem>>
    %715 = vector.broadcast %714 : f32 to vector<16x16xf32>
    %716 = arith.mulf %715, %701 : vector<16x16xf32>
    %717 = arith.addf %699, %716 : vector<16x16xf32>
    %c0_258 = arith.constant 0 : index
    %718 = memref.load %arg3[%c0_258] : memref<4xf32, #tpu.memory_space<smem>>
    %719 = vector.broadcast %718 : f32 to vector<16x16xf32>
    %720 = arith.mulf %705, %719 : vector<16x16xf32>
    %c0_259 = arith.constant 0 : index
    %721 = memref.load %arg4[%c0_259] : memref<4xf32, #tpu.memory_space<smem>>
    %722 = vector.broadcast %721 : f32 to vector<16x16xf32>
    %723 = arith.addf %720, %722 : vector<16x16xf32>
    %cst_260 = arith.constant 0.000000e+00 : f32
    %724 = vector.broadcast %cst_260 : f32 to vector<16x16xf32>
    %725 = arith.maximumf %723, %724 : vector<16x16xf32>
    %c1_261 = arith.constant 1 : index
    %726 = memref.load %arg3[%c1_261] : memref<4xf32, #tpu.memory_space<smem>>
    %727 = vector.broadcast %726 : f32 to vector<16x16xf32>
    %728 = arith.mulf %709, %727 : vector<16x16xf32>
    %c1_262 = arith.constant 1 : index
    %729 = memref.load %arg4[%c1_262] : memref<4xf32, #tpu.memory_space<smem>>
    %730 = vector.broadcast %729 : f32 to vector<16x16xf32>
    %731 = arith.addf %728, %730 : vector<16x16xf32>
    %cst_263 = arith.constant 0.000000e+00 : f32
    %732 = vector.broadcast %cst_263 : f32 to vector<16x16xf32>
    %733 = arith.maximumf %731, %732 : vector<16x16xf32>
    %c2_264 = arith.constant 2 : index
    %734 = memref.load %arg3[%c2_264] : memref<4xf32, #tpu.memory_space<smem>>
    %735 = vector.broadcast %734 : f32 to vector<16x16xf32>
    %736 = arith.mulf %713, %735 : vector<16x16xf32>
    %c2_265 = arith.constant 2 : index
    %737 = memref.load %arg4[%c2_265] : memref<4xf32, #tpu.memory_space<smem>>
    %738 = vector.broadcast %737 : f32 to vector<16x16xf32>
    %739 = arith.addf %736, %738 : vector<16x16xf32>
    %cst_266 = arith.constant 0.000000e+00 : f32
    %740 = vector.broadcast %cst_266 : f32 to vector<16x16xf32>
    %741 = arith.maximumf %739, %740 : vector<16x16xf32>
    %c3_267 = arith.constant 3 : index
    %742 = memref.load %arg3[%c3_267] : memref<4xf32, #tpu.memory_space<smem>>
    %743 = vector.broadcast %742 : f32 to vector<16x16xf32>
    %744 = arith.mulf %717, %743 : vector<16x16xf32>
    %c3_268 = arith.constant 3 : index
    %745 = memref.load %arg4[%c3_268] : memref<4xf32, #tpu.memory_space<smem>>
    %746 = vector.broadcast %745 : f32 to vector<16x16xf32>
    %747 = arith.addf %744, %746 : vector<16x16xf32>
    %cst_269 = arith.constant 0.000000e+00 : f32
    %748 = vector.broadcast %cst_269 : f32 to vector<16x16xf32>
    %749 = arith.maximumf %747, %748 : vector<16x16xf32>
    %c0_270 = arith.constant 0 : index
    %750 = memref.load %arg5[%c0_270] : memref<8xf32, #tpu.memory_space<smem>>
    %751 = vector.broadcast %750 : f32 to vector<16x16xf32>
    %752 = arith.mulf %725, %751 : vector<16x16xf32>
    %c0_271 = arith.constant 0 : index
    %753 = memref.load %arg6[%c0_271] : memref<2xf32, #tpu.memory_space<smem>>
    %754 = vector.broadcast %753 : f32 to vector<16x16xf32>
    %755 = arith.addf %752, %754 : vector<16x16xf32>
    %c1_272 = arith.constant 1 : index
    %756 = memref.load %arg5[%c1_272] : memref<8xf32, #tpu.memory_space<smem>>
    %757 = vector.broadcast %756 : f32 to vector<16x16xf32>
    %758 = arith.mulf %757, %733 : vector<16x16xf32>
    %759 = arith.addf %755, %758 : vector<16x16xf32>
    %c2_273 = arith.constant 2 : index
    %760 = memref.load %arg5[%c2_273] : memref<8xf32, #tpu.memory_space<smem>>
    %761 = vector.broadcast %760 : f32 to vector<16x16xf32>
    %762 = arith.mulf %761, %741 : vector<16x16xf32>
    %763 = arith.addf %759, %762 : vector<16x16xf32>
    %c3_274 = arith.constant 3 : index
    %764 = memref.load %arg5[%c3_274] : memref<8xf32, #tpu.memory_space<smem>>
    %765 = vector.broadcast %764 : f32 to vector<16x16xf32>
    %766 = arith.mulf %765, %749 : vector<16x16xf32>
    %767 = arith.addf %763, %766 : vector<16x16xf32>
    %c1_275 = arith.constant 1 : index
    %c0_276 = arith.constant 0 : index
    %c0_277 = arith.constant 0 : index
    %c0_278 = arith.constant 0 : index
    %768 = vector.load %arg7[%c1_275, %c0_276, %c0_277, %c0_278] : memref<2x2x16x16xf32, #tpu.memory_space<vmem>>, vector<1x1x16x16xf32>
    %769 = vector.shape_cast %768 : vector<1x1x16x16xf32> to vector<16x16xf32>
    %770 = vector.shape_cast %767 : vector<16x16xf32> to vector<1x1x16x16xf32>
    tpu.vector_store %arg7[%c1_275, %c0_276, %c0_277, %c0_278], %770 {strides = array<i32>} : memref<2x2x16x16xf32, #tpu.memory_space<vmem>>, vector<1x1x16x16xf32>,
    %c4_279 = arith.constant 4 : index
    %771 = memref.load %arg5[%c4_279] : memref<8xf32, #tpu.memory_space<smem>>
    %772 = vector.broadcast %771 : f32 to vector<16x16xf32>
    %773 = arith.mulf %725, %772 : vector<16x16xf32>
    %c1_280 = arith.constant 1 : index
    %774 = memref.load %arg6[%c1_280] : memref<2xf32, #tpu.memory_space<smem>>
    %775 = vector.broadcast %774 : f32 to vector<16x16xf32>
    %776 = arith.addf %773, %775 : vector<16x16xf32>
    %c5_281 = arith.constant 5 : index
    %777 = memref.load %arg5[%c5_281] : memref<8xf32, #tpu.memory_space<smem>>
    %778 = vector.broadcast %777 : f32 to vector<16x16xf32>
    %779 = arith.mulf %778, %733 : vector<16x16xf32>
    %780 = arith.addf %776, %779 : vector<16x16xf32>
    %c6_282 = arith.constant 6 : index
    %781 = memref.load %arg5[%c6_282] : memref<8xf32, #tpu.memory_space<smem>>
    %782 = vector.broadcast %781 : f32 to vector<16x16xf32>
    %783 = arith.mulf %782, %741 : vector<16x16xf32>
    %784 = arith.addf %780, %783 : vector<16x16xf32>
    %c7_283 = arith.constant 7 : index
    %785 = memref.load %arg5[%c7_283] : memref<8xf32, #tpu.memory_space<smem>>
    %786 = vector.broadcast %785 : f32 to vector<16x16xf32>
    %787 = arith.mulf %786, %749 : vector<16x16xf32>
    %788 = arith.addf %784, %787 : vector<16x16xf32>
    %c1_284 = arith.constant 1 : index
    %c1_285 = arith.constant 1 : index
    %c0_286 = arith.constant 0 : index
    %c0_287 = arith.constant 0 : index
    %789 = vector.load %arg7[%c1_284, %c1_285, %c0_286, %c0_287] : memref<2x2x16x16xf32, #tpu.memory_space<vmem>>, vector<1x1x16x16xf32>
    %790 = vector.shape_cast %789 : vector<1x1x16x16xf32> to vector<16x16xf32>
    %791 = vector.shape_cast %788 : vector<16x16xf32> to vector<1x1x16x16xf32>
    tpu.vector_store %arg7[%c1_284, %c1_285, %c0_286, %c0_287], %791 {strides = array<i32>} : memref<2x2x16x16xf32, #tpu.memory_space<vmem>>, vector<1x1x16x16xf32>,
    return
  }
  func.func @transform_0(%arg0: i32) -> (i32, i32, i32, i32) {
    %c0_i32 = arith.constant 0 : i32
    %c0_i32_0 = arith.constant 0 : i32
    %c0_i32_1 = arith.constant 0 : i32
    %c0_i32_2 = arith.constant 0 : i32
    %c0_i32_3 = arith.constant 0 : i32
    return %c0_i32, %c0_i32_0, %c0_i32_1, %c0_i32_2 : i32, i32, i32, i32
  }
  func.func @transform_1(%arg0: i32) -> i32 {
    %c0_i32 = arith.constant 0 : i32
    %c0_i32_0 = arith.constant 0 : i32
    return %c0_i32 : i32
  }
  func.func @transform_2(%arg0: i32) -> i32 {
    %c0_i32 = arith.constant 0 : i32
    %c0_i32_0 = arith.constant 0 : i32
    return %c0_i32 : i32
  }
  func.func @transform_3(%arg0: i32) -> i32 {
    %c0_i32 = arith.constant 0 : i32
    %c0_i32_0 = arith.constant 0 : i32
    return %c0_i32 : i32
  }
  func.func @transform_4(%arg0: i32) -> i32 {
    %c0_i32 = arith.constant 0 : i32
    %c0_i32_0 = arith.constant 0 : i32
    return %c0_i32 : i32
  }
  func.func @transform_5(%arg0: i32) -> i32 {
    %c0_i32 = arith.constant 0 : i32
    %c0_i32_0 = arith.constant 0 : i32
    return %c0_i32 : i32
  }
  func.func @transform_6(%arg0: i32) -> (i32, i32, i32, i32) {
    %c0_i32 = arith.constant 0 : i32
    %c0_i32_0 = arith.constant 0 : i32
    %c0_i32_1 = arith.constant 0 : i32
    %c0_i32_2 = arith.constant 0 : i32
    %c0_i32_3 = arith.constant 0 : i32
    return %c0_i32, %c0_i32_0, %c0_i32_1, %c0_i32_2 : i32, i32, i32, i32
  }
}

</mosaic_0001>

<llo_original>
// kernel: tpu_custom_call.1
$region0: #{tpu_custom_call.1}
  #allocation0 [shape = 'u32[]', space=smem, size = 0x4, offset = 0x4, fixed_abs, tag = 'smem constant byte address 0x4 - core index']
  #allocation1 [shape = 'u32[144,128]{1,0:T(1,128)}', space=vmem, size = 0x12000, scoped, tag = 'internal scratch']
  #allocation2 [shape = 'f32[2,2,18,18]{3,2,1,0:T(8,128)}', space=vmem, size = 0xc000, scoped, tag = 'scratch operand']
  %s0 = inlined_call_operand.hbm [shape: f32[2,2,16,16], index: 0, kind: input, shape index: {}]
  %s1 = inlined_call_operand.vmem [shape: f32[72], index: 1, kind: input, shape index: {}]
  %s2 = inlined_call_operand.vmem [shape: f32[4], index: 2, kind: input, shape index: {}]
  %s3 = inlined_call_operand.vmem [shape: f32[4], index: 3, kind: input, shape index: {}]
  %s4 = inlined_call_operand.vmem [shape: f32[8], index: 4, kind: input, shape index: {}]
  %s5 = inlined_call_operand.vmem [shape: f32[2], index: 5, kind: input, shape index: {}]
  %s6 = inlined_call_operand.hbm [shape: f32[2,2,16,16], index: 6, kind: output, shape index: {}]
  %s7 = sld [smem:[#allocation0]]
  $region58: #{tpu_custom_call.1} parent=0
    _
  %s9 = ssub.s32 1, %s7
  %s10 = scalar_select 0, %s9, %s7
  $region1: #{tpu_custom_call.1} parent=0
    #allocation3 [shape = 'u8[32768]{0}', space=vmem, size = 0x8000, scoped, tag = 'input window, operand 0, single buffered']
    #allocation4 [shape = 's32[1]{0}', space=sflag, size = 0x4, scoped, tag = 'scoped memory for tpu_custom_call.1']
    #allocation5 [shape = 's32[1]{0}', space=sflag, size = 0x4, scoped, tag = 'scoped memory for tpu_custom_call.1']
    #allocation6 [shape = 's32[1]{0}', space=sflag, size = 0x4, scoped, tag = 'scoped memory for tpu_custom_call.1']
    #allocation7 [shape = 'u8[512]{0}', space=smem, size = 0x200, scoped, tag = 'input window, operand 1, single buffered']
    #allocation8 [shape = 'u8[512]{0}', space=smem, size = 0x200, scoped, tag = 'input window, operand 2, single buffered']
    #allocation9 [shape = 's32[1]{0}', space=sflag, size = 0x4, scoped, tag = 'scoped memory for tpu_custom_call.1']
    #allocation10 [shape = 'u8[512]{0}', space=smem, size = 0x200, scoped, tag = 'input window, operand 3, single buffered']
    #allocation11 [shape = 'u8[512]{0}', space=smem, size = 0x200, scoped, tag = 'input window, operand 4, single buffered']
    #allocation12 [shape = 's32[1]{0}', space=sflag, size = 0x4, scoped, tag = 'scoped memory for tpu_custom_call.1']
    #allocation13 [shape = 'u8[512]{0}', space=smem, size = 0x200, scoped, tag = 'input window, operand 5, single buffered']
    #allocation14 [shape = 'u8[32768]{0}', space=vmem, size = 0x8000, scoped, tag = 'output window, operand 0, single buffered']
    %11 = vsyncpa [#allocation4], 0
    %12 = vsyncpa [#allocation6], 0
    %13 = vsyncpa [#allocation9], 0
    %14 = vsyncpa [#allocation12], 0
    %15 = vsyncpa [#allocation5], 0
    // Predicated region
    $region2: #{tpu_custom_call.1} parent=1 // pred_check
      _
    $region3: #{tpu_custom_call.1} parent=1 // pred_check_branch
      %17 = sbr.rel (0) target = $region5
    $region4: #{tpu_custom_call.1} parent=1 // pred_region
      %s19 = ssub.s32 1024, 1024
      %20 = vsyncadd [#allocation4], %s19
      %s21 = sshll.u32 [#allocation3], 4
      %s22 = int_to_ptr.vmem [resolvable:$true] %s21
      %27 = dma.hbm_to_vmem [thread:$0]  %s0, 1024, %s22, [#allocation4], 128, 128, 8
    $region5: #{tpu_custom_call.1} parent=1 // pred_fallthru
      _
    // Predicated region
    $region6: #{tpu_custom_call.1} parent=1 // pred_check
      _
    $region7: #{tpu_custom_call.1} parent=1 // pred_check_branch
      %29 = sbr.rel (0) target = $region9
    $region8: #{tpu_custom_call.1} parent=1 // pred_region
      %s31 = ssub.s32 16, 16
      %32 = vsyncadd [#allocation6], %s31
      %s34 = sshll.u32 %s1, 4
      %s35 = int_to_ptr.vmem [resolvable:$true] %s34
      %37 = dma.vmem_to_smem %s35, 16, [#allocation7], [#allocation6]
    $region9: #{tpu_custom_call.1} parent=1 // pred_fallthru
      _
    // Predicated region
    $region10: #{tpu_custom_call.1} parent=1 // pred_check
      _
    $region11: #{tpu_custom_call.1} parent=1 // pred_check_branch
      %39 = sbr.rel (0) target = $region13
    $region12: #{tpu_custom_call.1} parent=1 // pred_region
      %s41 = ssub.s32 16, 16
      %42 = vsyncadd [#allocation9], %s41
      %s44 = sshll.u32 %s2, 4
      %s45 = int_to_ptr.vmem [resolvable:$true] %s44
      %47 = dma.vmem_to_smem %s45, 16, [#allocation8], [#allocation9]
    $region13: #{tpu_custom_call.1} parent=1 // pred_fallthru
      _
    // Predicated region
    $region14: #{tpu_custom_call.1} parent=1 // pred_check
      _
    $region15: #{tpu_custom_call.1} parent=1 // pred_check_branch
      %49 = sbr.rel (0) target = $region17
    $region16: #{tpu_custom_call.1} parent=1 // pred_region
      %s51 = ssub.s32 16, 16
      %52 = vsyncadd [#allocation9], %s51
      %s54 = sshll.u32 %s3, 4
      %s55 = int_to_ptr.vmem [resolvable:$true] %s54
      %57 = dma.vmem_to_smem %s55, 16, [#allocation10], [#allocation9]
    $region17: #{tpu_custom_call.1} parent=1 // pred_fallthru
      _
    // Predicated region
    $region18: #{tpu_custom_call.1} parent=1 // pred_check
      _
    $region19: #{tpu_custom_call.1} parent=1 // pred_check_branch
      %59 = sbr.rel (0) target = $region21
    $region20: #{tpu_custom_call.1} parent=1 // pred_region
      %s61 = ssub.s32 16, 16
      %62 = vsyncadd [#allocation12], %s61
      %s64 = sshll.u32 %s4, 4
      %s65 = int_to_ptr.vmem [resolvable:$true] %s64
      %67 = dma.vmem_to_smem %s65, 16, [#allocation11], [#allocation12]
    $region21: #{tpu_custom_call.1} parent=1 // pred_fallthru
      _
    // Predicated region
    $region22: #{tpu_custom_call.1} parent=1 // pred_check
      _
    $region23: #{tpu_custom_call.1} parent=1 // pred_check_branch
      %69 = sbr.rel (0) target = $region25
    $region24: #{tpu_custom_call.1} parent=1 // pred_region
      %s71 = ssub.s32 16, 16
      %72 = vsyncadd [#allocation12], %s71
      %s74 = sshll.u32 %s5, 4
      %s75 = int_to_ptr.vmem [resolvable:$true] %s74
      %77 = dma.vmem_to_smem %s75, 16, [#allocation13], [#allocation12]
    $region25: #{tpu_custom_call.1} parent=1 // pred_fallthru
      _
    // Predicated region
    $region26: #{tpu_custom_call.1} parent=1 // pred_check
      _
    $region27: #{tpu_custom_call.1} parent=1 // pred_check_branch
      %79 = sbr.rel (0) target = $region29
    $region28: #{tpu_custom_call.1} parent=1 // pred_region
      %80 = dma.done [#allocation4], 1024
    $region29: #{tpu_custom_call.1} parent=1 // pred_fallthru
      _
    // Predicated region
    $region30: #{tpu_custom_call.1} parent=1 // pred_check
      _
    $region31: #{tpu_custom_call.1} parent=1 // pred_check_branch
      %82 = sbr.rel (0) target = $region33
    $region32: #{tpu_custom_call.1} parent=1 // pred_region
      %83 = dma.done [#allocation6], 16
    $region33: #{tpu_custom_call.1} parent=1 // pred_fallthru
      _
    // Predicated region
    $region34: #{tpu_custom_call.1} parent=1 // pred_check
      _
    $region35: #{tpu_custom_call.1} parent=1 // pred_check_branch
      %85 = sbr.rel (0) target = $region37
    $region36: #{tpu_custom_call.1} parent=1 // pred_region
      %86 = dma.done [#allocation9], 16
    $region37: #{tpu_custom_call.1} parent=1 // pred_fallthru
      _
    // Predicated region
    $region38: #{tpu_custom_call.1} parent=1 // pred_check
      _
    $region39: #{tpu_custom_call.1} parent=1 // pred_check_branch
      %88 = sbr.rel (0) target = $region41
    $region40: #{tpu_custom_call.1} parent=1 // pred_region
      %89 = dma.done [#allocation9], 16
    $region41: #{tpu_custom_call.1} parent=1 // pred_fallthru
      _
    // Predicated region
    $region42: #{tpu_custom_call.1} parent=1 // pred_check
      _
    $region43: #{tpu_custom_call.1} parent=1 // pred_check_branch
      %91 = sbr.rel (0) target = $region45
    $region44: #{tpu_custom_call.1} parent=1 // pred_region
      %92 = dma.done [#allocation12], 16
    $region45: #{tpu_custom_call.1} parent=1 // pred_fallthru
      _
    // Predicated region
    $region46: #{tpu_custom_call.1} parent=1 // pred_check
      _
    $region47: #{tpu_custom_call.1} parent=1 // pred_check_branch
      %94 = sbr.rel (0) target = $region49
    $region48: #{tpu_custom_call.1} parent=1 // pred_region
      %95 = dma.done [#allocation12], 16
    $region49: #{tpu_custom_call.1} parent=1 // pred_fallthru
      _
    %96 = sfence
    %vm97 = vcmask 146432
    %98 = vst.msk [vmem:[#allocation2] sm:$0xff] %vm97, 0.0
    %99 = vst.msk [vmem:[#allocation2 + $0x8] sm:$0xff] %vm97, 0.0
    %vm100 = vcmask 140288
    %101 = vst.msk [vmem:[#allocation2 + $0x10] sm:$0x3] %vm100, 0.0
    %102 = vst.msk [vmem:[#allocation2 + $0x18] sm:$0xff] %vm97, 0.0
    %103 = vst.msk [vmem:[#allocation2 + $0x20] sm:$0xff] %vm97, 0.0
    %104 = vst.msk [vmem:[#allocation2 + $0x28] sm:$0x3] %vm100, 0.0
    %105 = vst.msk [vmem:[#allocation2 + $0x30] sm:$0xff] %vm97, 0.0
    %106 = vst.msk [vmem:[#allocation2 + $0x38] sm:$0xff] %vm97, 0.0
    %107 = vst.msk [vmem:[#allocation2 + $0x40] sm:$0x3] %vm100, 0.0
    %108 = vst.msk [vmem:[#allocation2 + $0x48] sm:$0xff] %vm97, 0.0
    %109 = vst.msk [vmem:[#allocation2 + $0x50] sm:$0xff] %vm97, 0.0
    %110 = vst.msk [vmem:[#allocation2 + $0x58] sm:$0x3] %vm100, 0.0
    %v111 = vld [vmem:[#allocation3] sm:$0xff]
    %v112 = vld [vmem:[#allocation3 + $0x8] sm:$0xff]
    %v113 = vld [vmem:[#allocation3 + $0x10] sm:$0xff]
    %v114 = vld [vmem:[#allocation3 + $0x18] sm:$0xff]
    %v115 = vld [vmem:[#allocation3 + $0x20] sm:$0xff]
    %v116 = vld [vmem:[#allocation3 + $0x28] sm:$0xff]
    %v117 = vld [vmem:[#allocation3 + $0x30] sm:$0xff]
    %v118 = vld [vmem:[#allocation3 + $0x38] sm:$0xff]
    %127 = vrot.lane.b32.xlu0 %v111, 1
    %v128 = vpop.permute.xlu0 %127
    %129 = vrot.lane.b32.xlu0 %v112, 1
    %v130 = vpop.permute.xlu0 %129
    %131 = vrot.lane.b32.xlu0 %v113, 1
    %v132 = vpop.permute.xlu0 %131
    %133 = vrot.lane.b32.xlu0 %v114, 1
    %v134 = vpop.permute.xlu0 %133
    %135 = vrot.lane.b32.xlu0 %v115, 1
    %v136 = vpop.permute.xlu0 %135
    %137 = vrot.lane.b32.xlu0 %v116, 1
    %v138 = vpop.permute.xlu0 %137
    %139 = vrot.lane.b32.xlu0 %v117, 1
    %v140 = vpop.permute.xlu0 %139
    %141 = vrot.lane.b32.xlu0 %v118, 1
    %v142 = vpop.permute.xlu0 %141
    %vm151 = vcmask 138248
    %152 = vst.msk [vmem:[#allocation2 + $0x1] sm:$0xff] %vm151, %v128
    %153 = vst.msk [vmem:[#allocation2 + $0x9] sm:$0xff] %vm151, %v130
    %154 = vst.msk [vmem:[#allocation2 + $0x19] sm:$0xff] %vm151, %v132
    %155 = vst.msk [vmem:[#allocation2 + $0x21] sm:$0xff] %vm151, %v134
    %156 = vst.msk [vmem:[#allocation2 + $0x31] sm:$0xff] %vm151, %v136
    %157 = vst.msk [vmem:[#allocation2 + $0x39] sm:$0xff] %vm151, %v138
    %158 = vst.msk [vmem:[#allocation2 + $0x49] sm:$0xff] %vm151, %v140
    %159 = vst.msk [vmem:[#allocation2 + $0x51] sm:$0xff] %vm151, %v142
    %v160 = vld [vmem:[#allocation2] sm:$0xff]
    %v161 = vld [vmem:[#allocation2 + $0x8] sm:$0xff]
    %s162 = sld [smem:[#allocation7]]
    %v163 = vstv %s162
    %v164 = vmul.f32 %v163, %v160
    %v165 = vmul.f32 %v163, %v161
    %s166 = sld [smem:[#allocation7 + $0x12]]
    %v167 = vstv %s166
    %v168 = vmul.f32 %v167, %v160
    %v169 = vmul.f32 %v167, %v161
    %s170 = sld [smem:[#allocation7 + $0x24]]
    %v171 = vstv %s170
    %v172 = vmul.f32 %v171, %v160
    %v173 = vmul.f32 %v171, %v161
    %s174 = sld [smem:[#allocation7 + $0x36]]
    %v175 = vstv %s174
    %v176 = vmul.f32 %v175, %v160
    %v177 = vmul.f32 %v175, %v161
    %s178 = sld [smem:[#allocation7 + $0x1]]
    %v179 = vstv %s178
    %v180 = vmul.f32 %v179, %v160
    %v181 = vmul.f32 %v179, %v161
    %184 = vrot.lane.b32.xlu0 %v180, 127
    %v185 = vpop.permute.xlu0 %184
    %186 = vrot.lane.b32.xlu0 %v181, 127
    %v187 = vpop.permute.xlu0 %186
    %v190 = vadd.f32 %v164, %v185
    %v191 = vadd.f32 %v165, %v187
    %s192 = sld [smem:[#allocation7 + $0x13]]
    %v193 = vstv %s192
    %v194 = vmul.f32 %v193, %v160
    %v195 = vmul.f32 %v193, %v161
    %198 = vrot.lane.b32.xlu0 %v194, 127
    %v199 = vpop.permute.xlu0 %198
    %200 = vrot.lane.b32.xlu0 %v195, 127
    %v201 = vpop.permute.xlu0 %200
    %v204 = vadd.f32 %v168, %v199
    %v205 = vadd.f32 %v169, %v201
    %s206 = sld [smem:[#allocation7 + $0x25]]
    %v207 = vstv %s206
    %v208 = vmul.f32 %v207, %v160
    %v209 = vmul.f32 %v207, %v161
    %212 = vrot.lane.b32.xlu0 %v208, 127
    %v213 = vpop.permute.xlu0 %212
    %214 = vrot.lane.b32.xlu0 %v209, 127
    %v215 = vpop.permute.xlu0 %214
    %v218 = vadd.f32 %v172, %v213
    %v219 = vadd.f32 %v173, %v215
    %s220 = sld [smem:[#allocation7 + $0x37]]
    %v221 = vstv %s220
    %v222 = vmul.f32 %v221, %v160
    %v223 = vmul.f32 %v221, %v161
    %226 = vrot.lane.b32.xlu0 %v222, 127
    %v227 = vpop.permute.xlu0 %226
    %228 = vrot.lane.b32.xlu0 %v223, 127
    %v229 = vpop.permute.xlu0 %228
    %v232 = vadd.f32 %v176, %v227
    %v233 = vadd.f32 %v177, %v229
    %s234 = sld [smem:[#allocation7 + $0x2]]
    %v235 = vstv %s234
    %v236 = vmul.f32 %v235, %v160
    %v237 = vmul.f32 %v235, %v161
    %240 = vrot.lane.b32.xlu0 %v236, 126
    %v241 = vpop.permute.xlu0 %240
    %242 = vrot.lane.b32.xlu0 %v237, 126
    %v243 = vpop.permute.xlu0 %242
    %v246 = vadd.f32 %v190, %v241
    %v247 = vadd.f32 %v191, %v243
    %s248 = sld [smem:[#allocation7 + $0x14]]
    %v249 = vstv %s248
    %v250 = vmul.f32 %v249, %v160
    %v251 = vmul.f32 %v249, %v161
    %254 = vrot.lane.b32.xlu0 %v250, 126
    %v255 = vpop.permute.xlu0 %254
    %256 = vrot.lane.b32.xlu0 %v251, 126
    %v257 = vpop.permute.xlu0 %256
    %v260 = vadd.f32 %v204, %v255
    %v261 = vadd.f32 %v205, %v257
    %s262 = sld [smem:[#allocation7 + $0x26]]
    %v263 = vstv %s262
    %v264 = vmul.f32 %v263, %v160
    %v265 = vmul.f32 %v263, %v161
    %268 = vrot.lane.b32.xlu0 %v264, 126
    %v269 = vpop.permute.xlu0 %268
    %270 = vrot.lane.b32.xlu0 %v265, 126
    %v271 = vpop.permute.xlu0 %270
    %v274 = vadd.f32 %v218, %v269
    %v275 = vadd.f32 %v219, %v271
    %s276 = sld [smem:[#allocation7 + $0x38]]
    %v277 = vstv %s276
    %v278 = vmul.f32 %v277, %v160
    %v279 = vmul.f32 %v277, %v161
    %282 = vrot.lane.b32.xlu0 %v278, 126
    %v283 = vpop.permute.xlu0 %282
    %284 = vrot.lane.b32.xlu0 %v279, 126
    %v285 = vpop.permute.xlu0 %284
    %v288 = vadd.f32 %v232, %v283
    %v289 = vadd.f32 %v233, %v285
    %v290 = vld [vmem:[#allocation2 + $0x1] sm:$0xff]
    %v291 = vld [vmem:[#allocation2 + $0x9] sm:$0xff]
    %s292 = sld [smem:[#allocation7 + $0x3]]
    %v293 = vstv %s292
    %v294 = vmul.f32 %v293, %v290
    %v295 = vmul.f32 %v293, %v291
    %v296 = vadd.f32 %v246, %v294
    %v297 = vadd.f32 %v247, %v295
    %s298 = sld [smem:[#allocation7 + $0x15]]
    %v299 = vstv %s298
    %v300 = vmul.f32 %v299, %v290
    %v301 = vmul.f32 %v299, %v291
    %v302 = vadd.f32 %v260, %v300
    %v303 = vadd.f32 %v261, %v301
    %s304 = sld [smem:[#allocation7 + $0x27]]
    %v305 = vstv %s304
    %v306 = vmul.f32 %v305, %v290
    %v307 = vmul.f32 %v305, %v291
    %v308 = vadd.f32 %v274, %v306
    %v309 = vadd.f32 %v275, %v307
    %s310 = sld [smem:[#allocation7 + $0x39]]
    %v311 = vstv %s310
    %v312 = vmul.f32 %v311, %v290
    %v313 = vmul.f32 %v311, %v291
    %v314 = vadd.f32 %v288, %v312
    %v315 = vadd.f32 %v289, %v313
    %s316 = sld [smem:[#allocation7 + $0x4]]
    %v317 = vstv %s316
    %v318 = vmul.f32 %v317, %v290
    %v319 = vmul.f32 %v317, %v291
    %322 = vrot.lane.b32.xlu0 %v318, 127
    %v323 = vpop.permute.xlu0 %322
    %324 = vrot.lane.b32.xlu0 %v319, 127
    %v325 = vpop.permute.xlu0 %324
    %v328 = vadd.f32 %v296, %v323
    %v329 = vadd.f32 %v297, %v325
    %s330 = sld [smem:[#allocation7 + $0x16]]
    %v331 = vstv %s330
    %v332 = vmul.f32 %v331, %v290
    %v333 = vmul.f32 %v331, %v291
    %336 = vrot.lane.b32.xlu0 %v332, 127
    %v337 = vpop.permute.xlu0 %336
    %338 = vrot.lane.b32.xlu0 %v333, 127
    %v339 = vpop.permute.xlu0 %338
    %v342 = vadd.f32 %v302, %v337
    %v343 = vadd.f32 %v303, %v339
    %s344 = sld [smem:[#allocation7 + $0x28]]
    %v345 = vstv %s344
    %v346 = vmul.f32 %v345, %v290
    %v347 = vmul.f32 %v345, %v291
    %350 = vrot.lane.b32.xlu0 %v346, 127
    %v351 = vpop.permute.xlu0 %350
    %352 = vrot.lane.b32.xlu0 %v347, 127
    %v353 = vpop.permute.xlu0 %352
    %v356 = vadd.f32 %v308, %v351
    %v357 = vadd.f32 %v309, %v353
    %s358 = sld [smem:[#allocation7 + $0x3a]]
    %v359 = vstv %s358
    %v360 = vmul.f32 %v359, %v290
    %v361 = vmul.f32 %v359, %v291
    %364 = vrot.lane.b32.xlu0 %v360, 127
    %v365 = vpop.permute.xlu0 %364
    %366 = vrot.lane.b32.xlu0 %v361, 127
    %v367 = vpop.permute.xlu0 %366
    %v370 = vadd.f32 %v314, %v365
    %v371 = vadd.f32 %v315, %v367
    %s372 = sld [smem:[#allocation7 + $0x5]]
    %v373 = vstv %s372
    %v374 = vmul.f32 %v373, %v290
    %v375 = vmul.f32 %v373, %v291
    %378 = vrot.lane.b32.xlu0 %v374, 126
    %v379 = vpop.permute.xlu0 %378
    %380 = vrot.lane.b32.xlu0 %v375, 126
    %v381 = vpop.permute.xlu0 %380
    %v384 = vadd.f32 %v328, %v379
    %v385 = vadd.f32 %v329, %v381
    %s386 = sld [smem:[#allocation7 + $0x17]]
    %v387 = vstv %s386
    %v388 = vmul.f32 %v387, %v290
    %v389 = vmul.f32 %v387, %v291
    %392 = vrot.lane.b32.xlu0 %v388, 126
    %v393 = vpop.permute.xlu0 %392
    %394 = vrot.lane.b32.xlu0 %v389, 126
    %v395 = vpop.permute.xlu0 %394
    %v398 = vadd.f32 %v342, %v393
    %v399 = vadd.f32 %v343, %v395
    %s400 = sld [smem:[#allocation7 + $0x29]]
    %v401 = vstv %s400
    %v402 = vmul.f32 %v401, %v290
    %v403 = vmul.f32 %v401, %v291
    %406 = vrot.lane.b32.xlu0 %v402, 126
    %v407 = vpop.permute.xlu0 %406
    %408 = vrot.lane.b32.xlu0 %v403, 126
    %v409 = vpop.permute.xlu0 %408
    %v412 = vadd.f32 %v356, %v407
    %v413 = vadd.f32 %v357, %v409
    %s414 = sld [smem:[#allocation7 + $0x3b]]
    %v415 = vstv %s414
    %v416 = vmul.f32 %v415, %v290
    %v417 = vmul.f32 %v415, %v291
    %420 = vrot.lane.b32.xlu0 %v416, 126
    %v421 = vpop.permute.xlu0 %420
    %422 = vrot.lane.b32.xlu0 %v417, 126
    %v423 = vpop.permute.xlu0 %422
    %v426 = vadd.f32 %v370, %v421
    %v427 = vadd.f32 %v371, %v423
    %v428 = vld [vmem:[#allocation2 + $0x2] sm:$0xff]
    %v429 = vld [vmem:[#allocation2 + $0xa] sm:$0xff]
    %s430 = sld [smem:[#allocation7 + $0x6]]
    %v431 = vstv %s430
    %v432 = vmul.f32 %v431, %v428
    %v433 = vmul.f32 %v431, %v429
    %v434 = vadd.f32 %v384, %v432
    %v435 = vadd.f32 %v385, %v433
    %s436 = sld [smem:[#allocation7 + $0x18]]
    %v437 = vstv %s436
    %v438 = vmul.f32 %v437, %v428
    %v439 = vmul.f32 %v437, %v429
    %v440 = vadd.f32 %v398, %v438
    %v441 = vadd.f32 %v399, %v439
    %s442 = sld [smem:[#allocation7 + $0x2a]]
    %v443 = vstv %s442
    %v444 = vmul.f32 %v443, %v428
    %v445 = vmul.f32 %v443, %v429
    %v446 = vadd.f32 %v412, %v444
    %v447 = vadd.f32 %v413, %v445
    %s448 = sld [smem:[#allocation7 + $0x3c]]
    %v449 = vstv %s448
    %v450 = vmul.f32 %v449, %v428
    %v451 = vmul.f32 %v449, %v429
    %v452 = vadd.f32 %v426, %v450
    %v453 = vadd.f32 %v427, %v451
    %s454 = sld [smem:[#allocation7 + $0x7]]
    %v455 = vstv %s454
    %v456 = vmul.f32 %v455, %v428
    %v457 = vmul.f32 %v455, %v429
    %460 = vrot.lane.b32.xlu0 %v456, 127
    %v461 = vpop.permute.xlu0 %460
    %462 = vrot.lane.b32.xlu0 %v457, 127
    %v463 = vpop.permute.xlu0 %462
    %v466 = vadd.f32 %v434, %v461
    %v467 = vadd.f32 %v435, %v463
    %s468 = sld [smem:[#allocation7 + $0x19]]
    %v469 = vstv %s468
    %v470 = vmul.f32 %v469, %v428
    %v471 = vmul.f32 %v469, %v429
    %474 = vrot.lane.b32.xlu0 %v470, 127
    %v475 = vpop.permute.xlu0 %474
    %476 = vrot.lane.b32.xlu0 %v471, 127
    %v477 = vpop.permute.xlu0 %476
    %v480 = vadd.f32 %v440, %v475
    %v481 = vadd.f32 %v441, %v477
    %s482 = sld [smem:[#allocation7 + $0x2b]]
    %v483 = vstv %s482
    %v484 = vmul.f32 %v483, %v428
    %v485 = vmul.f32 %v483, %v429
    %488 = vrot.lane.b32.xlu0 %v484, 127
    %v489 = vpop.permute.xlu0 %488
    %490 = vrot.lane.b32.xlu0 %v485, 127
    %v491 = vpop.permute.xlu0 %490
    %v494 = vadd.f32 %v446, %v489
    %v495 = vadd.f32 %v447, %v491
    %s496 = sld [smem:[#allocation7 + $0x3d]]
    %v497 = vstv %s496
    %v498 = vmul.f32 %v497, %v428
    %v499 = vmul.f32 %v497, %v429
    %502 = vrot.lane.b32.xlu0 %v498, 127
    %v503 = vpop.permute.xlu0 %502
    %504 = vrot.lane.b32.xlu0 %v499, 127
    %v505 = vpop.permute.xlu0 %504
    %v508 = vadd.f32 %v452, %v503
    %v509 = vadd.f32 %v453, %v505
    %s510 = sld [smem:[#allocation7 + $0x8]]
    %v511 = vstv %s510
    %v512 = vmul.f32 %v511, %v428
    %v513 = vmul.f32 %v511, %v429
    %516 = vrot.lane.b32.xlu0 %v512, 126
    %v517 = vpop.permute.xlu0 %516
    %518 = vrot.lane.b32.xlu0 %v513, 126
    %v519 = vpop.permute.xlu0 %518
    %v522 = vadd.f32 %v466, %v517
    %v523 = vadd.f32 %v467, %v519
    %s524 = sld [smem:[#allocation7 + $0x1a]]
    %v525 = vstv %s524
    %v526 = vmul.f32 %v525, %v428
    %v527 = vmul.f32 %v525, %v429
    %530 = vrot.lane.b32.xlu0 %v526, 126
    %v531 = vpop.permute.xlu0 %530
    %532 = vrot.lane.b32.xlu0 %v527, 126
    %v533 = vpop.permute.xlu0 %532
    %v536 = vadd.f32 %v480, %v531
    %v537 = vadd.f32 %v481, %v533
    %s538 = sld [smem:[#allocation7 + $0x2c]]
    %v539 = vstv %s538
    %v540 = vmul.f32 %v539, %v428
    %v541 = vmul.f32 %v539, %v429
    %544 = vrot.lane.b32.xlu0 %v540, 126
    %v545 = vpop.permute.xlu0 %544
    %546 = vrot.lane.b32.xlu0 %v541, 126
    %v547 = vpop.permute.xlu0 %546
    %v550 = vadd.f32 %v494, %v545
    %v551 = vadd.f32 %v495, %v547
    %s552 = sld [smem:[#allocation7 + $0x3e]]
    %v553 = vstv %s552
    %v554 = vmul.f32 %v553, %v428
    %v555 = vmul.f32 %v553, %v429
    %558 = vrot.lane.b32.xlu0 %v554, 126
    %v559 = vpop.permute.xlu0 %558
    %560 = vrot.lane.b32.xlu0 %v555, 126
    %v561 = vpop.permute.xlu0 %560
    %v564 = vadd.f32 %v508, %v559
    %v565 = vadd.f32 %v509, %v561
    %s566 = scalar_lea.vmem [#allocation2], 24
    %v567 = vld [vmem:[%s566] sm:$0xff]
    %v568 = vld [vmem:[%s566 + $0x8] sm:$0xff]
    %s569 = sld [smem:[#allocation7 + $0x9]]
    %v570 = vstv %s569
    %v571 = vmul.f32 %v570, %v567
    %v572 = vmul.f32 %v570, %v568
    %v573 = vadd.f32 %v522, %v571
    %v574 = vadd.f32 %v523, %v572
    %s575 = sld [smem:[#allocation7 + $0x1b]]
    %v576 = vstv %s575
    %v577 = vmul.f32 %v576, %v567
    %v578 = vmul.f32 %v576, %v568
    %v579 = vadd.f32 %v536, %v577
    %v580 = vadd.f32 %v537, %v578
    %s581 = sld [smem:[#allocation7 + $0x2d]]
    %v582 = vstv %s581
    %v583 = vmul.f32 %v582, %v567
    %v584 = vmul.f32 %v582, %v568
    %v585 = vadd.f32 %v550, %v583
    %v586 = vadd.f32 %v551, %v584
    %s587 = sld [smem:[#allocation7 + $0x3f]]
    %v588 = vstv %s587
    %v589 = vmul.f32 %v588, %v567
    %v590 = vmul.f32 %v588, %v568
    %v591 = vadd.f32 %v564, %v589
    %v592 = vadd.f32 %v565, %v590
    %s593 = sld [smem:[#allocation7 + $0xa]]
    %v594 = vstv %s593
    %v595 = vmul.f32 %v594, %v567
    %v596 = vmul.f32 %v594, %v568
    %599 = vrot.lane.b32.xlu0 %v595, 127
    %v600 = vpop.permute.xlu0 %599
    %601 = vrot.lane.b32.xlu0 %v596, 127
    %v602 = vpop.permute.xlu0 %601
    %v605 = vadd.f32 %v573, %v600
    %v606 = vadd.f32 %v574, %v602
    %s607 = sld [smem:[#allocation7 + $0x1c]]
    %v608 = vstv %s607
    %v609 = vmul.f32 %v608, %v567
    %v610 = vmul.f32 %v608, %v568
    %613 = vrot.lane.b32.xlu0 %v609, 127
    %v614 = vpop.permute.xlu0 %613
    %615 = vrot.lane.b32.xlu0 %v610, 127
    %v616 = vpop.permute.xlu0 %615
    %v619 = vadd.f32 %v579, %v614
    %v620 = vadd.f32 %v580, %v616
    %s621 = sld [smem:[#allocation7 + $0x2e]]
    %v622 = vstv %s621
    %v623 = vmul.f32 %v622, %v567
    %v624 = vmul.f32 %v622, %v568
    %627 = vrot.lane.b32.xlu0 %v623, 127
    %v628 = vpop.permute.xlu0 %627
    %629 = vrot.lane.b32.xlu0 %v624, 127
    %v630 = vpop.permute.xlu0 %629
    %v633 = vadd.f32 %v585, %v628
    %v634 = vadd.f32 %v586, %v630
    %s635 = sld [smem:[#allocation7 + $0x40]]
    %v636 = vstv %s635
    %v637 = vmul.f32 %v636, %v567
    %v638 = vmul.f32 %v636, %v568
    %641 = vrot.lane.b32.xlu0 %v637, 127
    %v642 = vpop.permute.xlu0 %641
    %643 = vrot.lane.b32.xlu0 %v638, 127
    %v644 = vpop.permute.xlu0 %643
    %v647 = vadd.f32 %v591, %v642
    %v648 = vadd.f32 %v592, %v644
    %s649 = sld [smem:[#allocation7 + $0xb]]
    %v650 = vstv %s649
    %v651 = vmul.f32 %v650, %v567
    %v652 = vmul.f32 %v650, %v568
    %655 = vrot.lane.b32.xlu0 %v651, 126
    %v656 = vpop.permute.xlu0 %655
    %657 = vrot.lane.b32.xlu0 %v652, 126
    %v658 = vpop.permute.xlu0 %657
    %v661 = vadd.f32 %v605, %v656
    %v662 = vadd.f32 %v606, %v658
    %s663 = sld [smem:[#allocation7 + $0x1d]]
    %v664 = vstv %s663
    %v665 = vmul.f32 %v664, %v567
    %v666 = vmul.f32 %v664, %v568
    %669 = vrot.lane.b32.xlu0 %v665, 126
    %v670 = vpop.permute.xlu0 %669
    %671 = vrot.lane.b32.xlu0 %v666, 126
    %v672 = vpop.permute.xlu0 %671
    %v675 = vadd.f32 %v619, %v670
    %v676 = vadd.f32 %v620, %v672
    %s677 = sld [smem:[#allocation7 + $0x2f]]
    %v678 = vstv %s677
    %v679 = vmul.f32 %v678, %v567
    %v680 = vmul.f32 %v678, %v568
    %683 = vrot.lane.b32.xlu0 %v679, 126
    %v684 = vpop.permute.xlu0 %683
    %685 = vrot.lane.b32.xlu0 %v680, 126
    %v686 = vpop.permute.xlu0 %685
    %v689 = vadd.f32 %v633, %v684
    %v690 = vadd.f32 %v634, %v686
    %s691 = sld [smem:[#allocation7 + $0x41]]
    %v692 = vstv %s691
    %v693 = vmul.f32 %v692, %v567
    %v694 = vmul.f32 %v692, %v568
    %697 = vrot.lane.b32.xlu0 %v693, 126
    %v698 = vpop.permute.xlu0 %697
    %699 = vrot.lane.b32.xlu0 %v694, 126
    %v700 = vpop.permute.xlu0 %699
    %v703 = vadd.f32 %v647, %v698
    %v704 = vadd.f32 %v648, %v700
    %v705 = vld [vmem:[%s566 + $0x1] sm:$0xff]
    %v706 = vld [vmem:[%s566 + $0x9] sm:$0xff]
    %s707 = sld [smem:[#allocation7 + $0xc]]
    %v708 = vstv %s707
    %v709 = vmul.f32 %v708, %v705
    %v710 = vmul.f32 %v708, %v706
    %v711 = vadd.f32 %v661, %v709
    %v712 = vadd.f32 %v662, %v710
    %s713 = sld [smem:[#allocation7 + $0x1e]]
    %v714 = vstv %s713
    %v715 = vmul.f32 %v714, %v705
    %v716 = vmul.f32 %v714, %v706
    %v717 = vadd.f32 %v675, %v715
    %v718 = vadd.f32 %v676, %v716
    %s719 = sld [smem:[#allocation7 + $0x30]]
    %v720 = vstv %s719
    %v721 = vmul.f32 %v720, %v705
    %v722 = vmul.f32 %v720, %v706
    %v723 = vadd.f32 %v689, %v721
    %v724 = vadd.f32 %v690, %v722
    %s725 = sld [smem:[#allocation7 + $0x42]]
    %v726 = vstv %s725
    %v727 = vmul.f32 %v726, %v705
    %v728 = vmul.f32 %v726, %v706
    %v729 = vadd.f32 %v703, %v727
    %v730 = vadd.f32 %v704, %v728
    %s731 = sld [smem:[#allocation7 + $0xd]]
    %v732 = vstv %s731
    %v733 = vmul.f32 %v732, %v705
    %v734 = vmul.f32 %v732, %v706
    %737 = vrot.lane.b32.xlu0 %v733, 127
    %v738 = vpop.permute.xlu0 %737
    %739 = vrot.lane.b32.xlu0 %v734, 127
    %v740 = vpop.permute.xlu0 %739
    %v743 = vadd.f32 %v711, %v738
    %v744 = vadd.f32 %v712, %v740
    %s745 = sld [smem:[#allocation7 + $0x1f]]
    %v746 = vstv %s745
    %v747 = vmul.f32 %v746, %v705
    %v748 = vmul.f32 %v746, %v706
    %751 = vrot.lane.b32.xlu0 %v747, 127
    %v752 = vpop.permute.xlu0 %751
    %753 = vrot.lane.b32.xlu0 %v748, 127
    %v754 = vpop.permute.xlu0 %753
    %v757 = vadd.f32 %v717, %v752
    %v758 = vadd.f32 %v718, %v754
    %s759 = sld [smem:[#allocation7 + $0x31]]
    %v760 = vstv %s759
    %v761 = vmul.f32 %v760, %v705
    %v762 = vmul.f32 %v760, %v706
    %765 = vrot.lane.b32.xlu0 %v761, 127
    %v766 = vpop.permute.xlu0 %765
    %767 = vrot.lane.b32.xlu0 %v762, 127
    %v768 = vpop.permute.xlu0 %767
    %v771 = vadd.f32 %v723, %v766
    %v772 = vadd.f32 %v724, %v768
    %s773 = sld [smem:[#allocation7 + $0x43]]
    %v774 = vstv %s773
    %v775 = vmul.f32 %v774, %v705
    %v776 = vmul.f32 %v774, %v706
    %779 = vrot.lane.b32.xlu0 %v775, 127
    %v780 = vpop.permute.xlu0 %779
    %781 = vrot.lane.b32.xlu0 %v776, 127
    %v782 = vpop.permute.xlu0 %781
    %v785 = vadd.f32 %v729, %v780
    %v786 = vadd.f32 %v730, %v782
    %s787 = sld [smem:[#allocation7 + $0xe]]
    %v788 = vstv %s787
    %v789 = vmul.f32 %v788, %v705
    %v790 = vmul.f32 %v788, %v706
    %793 = vrot.lane.b32.xlu0 %v789, 126
    %v794 = vpop.permute.xlu0 %793
    %795 = vrot.lane.b32.xlu0 %v790, 126
    %v796 = vpop.permute.xlu0 %795
    %v799 = vadd.f32 %v743, %v794
    %v800 = vadd.f32 %v744, %v796
    %s801 = sld [smem:[#allocation7 + $0x20]]
    %v802 = vstv %s801
    %v803 = vmul.f32 %v802, %v705
    %v804 = vmul.f32 %v802, %v706
    %807 = vrot.lane.b32.xlu0 %v803, 126
    %v808 = vpop.permute.xlu0 %807
    %809 = vrot.lane.b32.xlu0 %v804, 126
    %v810 = vpop.permute.xlu0 %809
    %v813 = vadd.f32 %v757, %v808
    %v814 = vadd.f32 %v758, %v810
    %s815 = sld [smem:[#allocation7 + $0x32]]
    %v816 = vstv %s815
    %v817 = vmul.f32 %v816, %v705
    %v818 = vmul.f32 %v816, %v706
    %821 = vrot.lane.b32.xlu0 %v817, 126
    %v822 = vpop.permute.xlu0 %821
    %823 = vrot.lane.b32.xlu0 %v818, 126
    %v824 = vpop.permute.xlu0 %823
    %v827 = vadd.f32 %v771, %v822
    %v828 = vadd.f32 %v772, %v824
    %s829 = sld [smem:[#allocation7 + $0x44]]
    %v830 = vstv %s829
    %v831 = vmul.f32 %v830, %v705
    %v832 = vmul.f32 %v830, %v706
    %835 = vrot.lane.b32.xlu0 %v831, 126
    %v836 = vpop.permute.xlu0 %835
    %837 = vrot.lane.b32.xlu0 %v832, 126
    %v838 = vpop.permute.xlu0 %837
    %v841 = vadd.f32 %v785, %v836
    %v842 = vadd.f32 %v786, %v838
    %v843 = vld [vmem:[%s566 + $0x2] sm:$0xff]
    %v844 = vld [vmem:[%s566 + $0xa] sm:$0xff]
    %s845 = sld [smem:[#allocation7 + $0xf]]
    %v846 = vstv %s845
    %v847 = vmul.f32 %v846, %v843
    %v848 = vmul.f32 %v846, %v844
    %v849 = vadd.f32 %v799, %v847
    %v850 = vadd.f32 %v800, %v848
    %s851 = sld [smem:[#allocation7 + $0x21]]
    %v852 = vstv %s851
    %v853 = vmul.f32 %v852, %v843
    %v854 = vmul.f32 %v852, %v844
    %v855 = vadd.f32 %v813, %v853
    %v856 = vadd.f32 %v814, %v854
    %s857 = sld [smem:[#allocation7 + $0x33]]
    %v858 = vstv %s857
    %v859 = vmul.f32 %v858, %v843
    %v860 = vmul.f32 %v858, %v844
    %v861 = vadd.f32 %v827, %v859
    %v862 = vadd.f32 %v828, %v860
    %s863 = sld [smem:[#allocation7 + $0x45]]
    %v864 = vstv %s863
    %v865 = vmul.f32 %v864, %v843
    %v866 = vmul.f32 %v864, %v844
    %v867 = vadd.f32 %v841, %v865
    %v868 = vadd.f32 %v842, %v866
    %s869 = sld [smem:[#allocation7 + $0x10]]
    %v870 = vstv %s869
    %v871 = vmul.f32 %v870, %v843
    %v872 = vmul.f32 %v870, %v844
    %875 = vrot.lane.b32.xlu0 %v871, 127
    %v876 = vpop.permute.xlu0 %875
    %877 = vrot.lane.b32.xlu0 %v872, 127
    %v878 = vpop.permute.xlu0 %877
    %v881 = vadd.f32 %v849, %v876
    %v882 = vadd.f32 %v850, %v878
    %s883 = sld [smem:[#allocation7 + $0x22]]
    %v884 = vstv %s883
    %v885 = vmul.f32 %v884, %v843
    %v886 = vmul.f32 %v884, %v844
    %889 = vrot.lane.b32.xlu0 %v885, 127
    %v890 = vpop.permute.xlu0 %889
    %891 = vrot.lane.b32.xlu0 %v886, 127
    %v892 = vpop.permute.xlu0 %891
    %v895 = vadd.f32 %v855, %v890
    %v896 = vadd.f32 %v856, %v892
    %s897 = sld [smem:[#allocation7 + $0x34]]
    %v898 = vstv %s897
    %v899 = vmul.f32 %v898, %v843
    %v900 = vmul.f32 %v898, %v844
    %903 = vrot.lane.b32.xlu0 %v899, 127
    %v904 = vpop.permute.xlu0 %903
    %905 = vrot.lane.b32.xlu0 %v900, 127
    %v906 = vpop.permute.xlu0 %905
    %v909 = vadd.f32 %v861, %v904
    %v910 = vadd.f32 %v862, %v906
    %s911 = sld [smem:[#allocation7 + $0x46]]
    %v912 = vstv %s911
    %v913 = vmul.f32 %v912, %v843
    %v914 = vmul.f32 %v912, %v844
    %917 = vrot.lane.b32.xlu0 %v913, 127
    %v918 = vpop.permute.xlu0 %917
    %919 = vrot.lane.b32.xlu0 %v914, 127
    %v920 = vpop.permute.xlu0 %919
    %v923 = vadd.f32 %v867, %v918
    %v924 = vadd.f32 %v868, %v920
    %s925 = sld [smem:[#allocation7 + $0x11]]
    %v926 = vstv %s925
    %v927 = vmul.f32 %v926, %v843
    %v928 = vmul.f32 %v926, %v844
    %931 = vrot.lane.b32.xlu0 %v927, 126
    %v932 = vpop.permute.xlu0 %931
    %933 = vrot.lane.b32.xlu0 %v928, 126
    %v934 = vpop.permute.xlu0 %933
    %v937 = vadd.f32 %v881, %v932
    %v938 = vadd.f32 %v882, %v934
    %s939 = sld [smem:[#allocation7 + $0x23]]
    %v940 = vstv %s939
    %v941 = vmul.f32 %v940, %v843
    %v942 = vmul.f32 %v940, %v844
    %945 = vrot.lane.b32.xlu0 %v941, 126
    %v946 = vpop.permute.xlu0 %945
    %947 = vrot.lane.b32.xlu0 %v942, 126
    %v948 = vpop.permute.xlu0 %947
    %v951 = vadd.f32 %v895, %v946
    %v952 = vadd.f32 %v896, %v948
    %s953 = sld [smem:[#allocation7 + $0x35]]
    %v954 = vstv %s953
    %v955 = vmul.f32 %v954, %v843
    %v956 = vmul.f32 %v954, %v844
    %959 = vrot.lane.b32.xlu0 %v955, 126
    %v960 = vpop.permute.xlu0 %959
    %961 = vrot.lane.b32.xlu0 %v956, 126
    %v962 = vpop.permute.xlu0 %961
    %v965 = vadd.f32 %v909, %v960
    %v966 = vadd.f32 %v910, %v962
    %s967 = sld [smem:[#allocation7 + $0x47]]
    %v968 = vstv %s967
    %v969 = vmul.f32 %v968, %v843
    %v970 = vmul.f32 %v968, %v844
    %973 = vrot.lane.b32.xlu0 %v969, 126
    %v974 = vpop.permute.xlu0 %973
    %975 = vrot.lane.b32.xlu0 %v970, 126
    %v976 = vpop.permute.xlu0 %975
    %v979 = vadd.f32 %v923, %v974
    %v980 = vadd.f32 %v924, %v976
    %s981 = sld [smem:[#allocation8]]
    %v982 = vstv %s981
    %v983 = vmul.f32 %v937, %v982
    %v984 = vmul.f32 %v938, %v982
    %s985 = sld [smem:[#allocation10]]
    %v986 = vstv %s985
    %v987 = vadd.f32 %v983, %v986
    %v988 = vadd.f32 %v984, %v986
    %v989 = vmax.f32 %v987, 0.0
    %v990 = vmax.f32 %v988, 0.0
    %s991 = sld [smem:[#allocation8 + $0x1]]
    %v992 = vstv %s991
    %v993 = vmul.f32 %v951, %v992
    %v994 = vmul.f32 %v952, %v992
    %s995 = sld [smem:[#allocation10 + $0x1]]
    %v996 = vstv %s995
    %v997 = vadd.f32 %v993, %v996
    %v998 = vadd.f32 %v994, %v996
    %v999 = vmax.f32 %v997, 0.0
    %v1000 = vmax.f32 %v998, 0.0
    %s1001 = sld [smem:[#allocation8 + $0x2]]
    %v1002 = vstv %s1001
    %v1003 = vmul.f32 %v965, %v1002
    %v1004 = vmul.f32 %v966, %v1002
    %s1005 = sld [smem:[#allocation10 + $0x2]]
    %v1006 = vstv %s1005
    %v1007 = vadd.f32 %v1003, %v1006
    %v1008 = vadd.f32 %v1004, %v1006
    %v1009 = vmax.f32 %v1007, 0.0
    %v1010 = vmax.f32 %v1008, 0.0
    %s1011 = sld [smem:[#allocation8 + $0x3]]
    %v1012 = vstv %s1011
    %v1013 = vmul.f32 %v979, %v1012
    %v1014 = vmul.f32 %v980, %v1012
    %s1015 = sld [smem:[#allocation10 + $0x3]]
    %v1016 = vstv %s1015
    %v1017 = vadd.f32 %v1013, %v1016
    %v1018 = vadd.f32 %v1014, %v1016
    %v1019 = vmax.f32 %v1017, 0.0
    %v1020 = vmax.f32 %v1018, 0.0
    %s1021 = sld [smem:[#allocation11]]
    %v1022 = vstv %s1021
    %v1023 = vmul.f32 %v989, %v1022
    %v1024 = vmul.f32 %v990, %v1022
    %s1025 = sld [smem:[#allocation13]]
    %v1026 = vstv %s1025
    %v1027 = vadd.f32 %v1023, %v1026
    %v1028 = vadd.f32 %v1024, %v1026
    %s1029 = sld [smem:[#allocation11 + $0x1]]
    %v1030 = vstv %s1029
    %v1031 = vmul.f32 %v1030, %v999
    %v1032 = vmul.f32 %v1030, %v1000
    %v1033 = vadd.f32 %v1027, %v1031
    %v1034 = vadd.f32 %v1028, %v1032
    %s1035 = sld [smem:[#allocation11 + $0x2]]
    %v1036 = vstv %s1035
    %v1037 = vmul.f32 %v1036, %v1009
    %v1038 = vmul.f32 %v1036, %v1010
    %v1039 = vadd.f32 %v1033, %v1037
    %v1040 = vadd.f32 %v1034, %v1038
    %s1041 = sld [smem:[#allocation11 + $0x3]]
    %v1042 = vstv %s1041
    %v1043 = vmul.f32 %v1042, %v1019
    %v1044 = vmul.f32 %v1042, %v1020
    %v1045 = vadd.f32 %v1039, %v1043
    %v1046 = vadd.f32 %v1040, %v1044
    %vm1047 = vcmask 130048
    %1048 = vst.msk [vmem:[#allocation14] sm:$0xff] %vm1047, %v1045
    %1049 = vst.msk [vmem:[#allocation14 + $0x8] sm:$0xff] %vm1047, %v1046
    %s1050 = sld [smem:[#allocation11 + $0x4]]
    %v1051 = vstv %s1050
    %v1052 = vmul.f32 %v989, %v1051
    %v1053 = vmul.f32 %v990, %v1051
    %s1054 = sld [smem:[#allocation13 + $0x1]]
    %v1055 = vstv %s1054
    %v1056 = vadd.f32 %v1052, %v1055
    %v1057 = vadd.f32 %v1053, %v1055
    %s1058 = sld [smem:[#allocation11 + $0x5]]
    %v1059 = vstv %s1058
    %v1060 = vmul.f32 %v1059, %v999
    %v1061 = vmul.f32 %v1059, %v1000
    %v1062 = vadd.f32 %v1056, %v1060
    %v1063 = vadd.f32 %v1057, %v1061
    %s1064 = sld [smem:[#allocation11 + $0x6]]
    %v1065 = vstv %s1064
    %v1066 = vmul.f32 %v1065, %v1009
    %v1067 = vmul.f32 %v1065, %v1010
    %v1068 = vadd.f32 %v1062, %v1066
    %v1069 = vadd.f32 %v1063, %v1067
    %s1070 = sld [smem:[#allocation11 + $0x7]]
    %v1071 = vstv %s1070
    %v1072 = vmul.f32 %v1071, %v1019
    %v1073 = vmul.f32 %v1071, %v1020
    %v1074 = vadd.f32 %v1068, %v1072
    %v1075 = vadd.f32 %v1069, %v1073
    %s1076 = scalar_lea.vmem [#allocation14], 16
    %1077 = vst.msk [vmem:[%s1076] sm:$0xff] %vm1047, %v1074
    %1078 = vst.msk [vmem:[%s1076 + $0x8] sm:$0xff] %vm1047, %v1075
    %s1079 = scalar_lea.vmem [#allocation2], 48
    %v1080 = vld [vmem:[%s1079] sm:$0xff]
    %v1081 = vld [vmem:[%s1079 + $0x8] sm:$0xff]
    %s1082 = sld [smem:[#allocation7]]
    %v1083 = vstv %s1082
    %v1084 = vmul.f32 %v1083, %v1080
    %v1085 = vmul.f32 %v1083, %v1081
    %s1086 = sld [smem:[#allocation7 + $0x12]]
    %v1087 = vstv %s1086
    %v1088 = vmul.f32 %v1087, %v1080
    %v1089 = vmul.f32 %v1087, %v1081
    %s1090 = sld [smem:[#allocation7 + $0x24]]
    %v1091 = vstv %s1090
    %v1092 = vmul.f32 %v1091, %v1080
    %v1093 = vmul.f32 %v1091, %v1081
    %s1094 = sld [smem:[#allocation7 + $0x36]]
    %v1095 = vstv %s1094
    %v1096 = vmul.f32 %v1095, %v1080
    %v1097 = vmul.f32 %v1095, %v1081
    %s1098 = sld [smem:[#allocation7 + $0x1]]
    %v1099 = vstv %s1098
    %v1100 = vmul.f32 %v1099, %v1080
    %v1101 = vmul.f32 %v1099, %v1081
    %1104 = vrot.lane.b32.xlu0 %v1100, 127
    %v1105 = vpop.permute.xlu0 %1104
    %1106 = vrot.lane.b32.xlu0 %v1101, 127
    %v1107 = vpop.permute.xlu0 %1106
    %v1110 = vadd.f32 %v1084, %v1105
    %v1111 = vadd.f32 %v1085, %v1107
    %s1112 = sld [smem:[#allocation7 + $0x13]]
    %v1113 = vstv %s1112
    %v1114 = vmul.f32 %v1113, %v1080
    %v1115 = vmul.f32 %v1113, %v1081
    %1118 = vrot.lane.b32.xlu0 %v1114, 127
    %v1119 = vpop.permute.xlu0 %1118
    %1120 = vrot.lane.b32.xlu0 %v1115, 127
    %v1121 = vpop.permute.xlu0 %1120
    %v1124 = vadd.f32 %v1088, %v1119
    %v1125 = vadd.f32 %v1089, %v1121
    %s1126 = sld [smem:[#allocation7 + $0x25]]
    %v1127 = vstv %s1126
    %v1128 = vmul.f32 %v1127, %v1080
    %v1129 = vmul.f32 %v1127, %v1081
    %1132 = vrot.lane.b32.xlu0 %v1128, 127
    %v1133 = vpop.permute.xlu0 %1132
    %1134 = vrot.lane.b32.xlu0 %v1129, 127
    %v1135 = vpop.permute.xlu0 %1134
    %v1138 = vadd.f32 %v1092, %v1133
    %v1139 = vadd.f32 %v1093, %v1135
    %s1140 = sld [smem:[#allocation7 + $0x37]]
    %v1141 = vstv %s1140
    %v1142 = vmul.f32 %v1141, %v1080
    %v1143 = vmul.f32 %v1141, %v1081
    %1146 = vrot.lane.b32.xlu0 %v1142, 127
    %v1147 = vpop.permute.xlu0 %1146
    %1148 = vrot.lane.b32.xlu0 %v1143, 127
    %v1149 = vpop.permute.xlu0 %1148
    %v1152 = vadd.f32 %v1096, %v1147
    %v1153 = vadd.f32 %v1097, %v1149
    %s1154 = sld [smem:[#allocation7 + $0x2]]
    %v1155 = vstv %s1154
    %v1156 = vmul.f32 %v1155, %v1080
    %v1157 = vmul.f32 %v1155, %v1081
    %1160 = vrot.lane.b32.xlu0 %v1156, 126
    %v1161 = vpop.permute.xlu0 %1160
    %1162 = vrot.lane.b32.xlu0 %v1157, 126
    %v1163 = vpop.permute.xlu0 %1162
    %v1166 = vadd.f32 %v1110, %v1161
    %v1167 = vadd.f32 %v1111, %v1163
    %s1168 = sld [smem:[#allocation7 + $0x14]]
    %v1169 = vstv %s1168
    %v1170 = vmul.f32 %v1169, %v1080
    %v1171 = vmul.f32 %v1169, %v1081
    %1174 = vrot.lane.b32.xlu0 %v1170, 126
    %v1175 = vpop.permute.xlu0 %1174
    %1176 = vrot.lane.b32.xlu0 %v1171, 126
    %v1177 = vpop.permute.xlu0 %1176
    %v1180 = vadd.f32 %v1124, %v1175
    %v1181 = vadd.f32 %v1125, %v1177
    %s1182 = sld [smem:[#allocation7 + $0x26]]
    %v1183 = vstv %s1182
    %v1184 = vmul.f32 %v1183, %v1080
    %v1185 = vmul.f32 %v1183, %v1081
    %1188 = vrot.lane.b32.xlu0 %v1184, 126
    %v1189 = vpop.permute.xlu0 %1188
    %1190 = vrot.lane.b32.xlu0 %v1185, 126
    %v1191 = vpop.permute.xlu0 %1190
    %v1194 = vadd.f32 %v1138, %v1189
    %v1195 = vadd.f32 %v1139, %v1191
    %s1196 = sld [smem:[#allocation7 + $0x38]]
    %v1197 = vstv %s1196
    %v1198 = vmul.f32 %v1197, %v1080
    %v1199 = vmul.f32 %v1197, %v1081
    %1202 = vrot.lane.b32.xlu0 %v1198, 126
    %v1203 = vpop.permute.xlu0 %1202
    %1204 = vrot.lane.b32.xlu0 %v1199, 126
    %v1205 = vpop.permute.xlu0 %1204
    %v1208 = vadd.f32 %v1152, %v1203
    %v1209 = vadd.f32 %v1153, %v1205
    %v1210 = vld [vmem:[%s1079 + $0x1] sm:$0xff]
    %v1211 = vld [vmem:[%s1079 + $0x9] sm:$0xff]
    %s1212 = sld [smem:[#allocation7 + $0x3]]
    %v1213 = vstv %s1212
    %v1214 = vmul.f32 %v1213, %v1210
    %v1215 = vmul.f32 %v1213, %v1211
    %v1216 = vadd.f32 %v1166, %v1214
    %v1217 = vadd.f32 %v1167, %v1215
    %s1218 = sld [smem:[#allocation7 + $0x15]]
    %v1219 = vstv %s1218
    %v1220 = vmul.f32 %v1219, %v1210
    %v1221 = vmul.f32 %v1219, %v1211
    %v1222 = vadd.f32 %v1180, %v1220
    %v1223 = vadd.f32 %v1181, %v1221
    %s1224 = sld [smem:[#allocation7 + $0x27]]
    %v1225 = vstv %s1224
    %v1226 = vmul.f32 %v1225, %v1210
    %v1227 = vmul.f32 %v1225, %v1211
    %v1228 = vadd.f32 %v1194, %v1226
    %v1229 = vadd.f32 %v1195, %v1227
    %s1230 = sld [smem:[#allocation7 + $0x39]]
    %v1231 = vstv %s1230
    %v1232 = vmul.f32 %v1231, %v1210
    %v1233 = vmul.f32 %v1231, %v1211
    %v1234 = vadd.f32 %v1208, %v1232
    %v1235 = vadd.f32 %v1209, %v1233
    %s1236 = sld [smem:[#allocation7 + $0x4]]
    %v1237 = vstv %s1236
    %v1238 = vmul.f32 %v1237, %v1210
    %v1239 = vmul.f32 %v1237, %v1211
    %1242 = vrot.lane.b32.xlu0 %v1238, 127
    %v1243 = vpop.permute.xlu0 %1242
    %1244 = vrot.lane.b32.xlu0 %v1239, 127
    %v1245 = vpop.permute.xlu0 %1244
    %v1248 = vadd.f32 %v1216, %v1243
    %v1249 = vadd.f32 %v1217, %v1245
    %s1250 = sld [smem:[#allocation7 + $0x16]]
    %v1251 = vstv %s1250
    %v1252 = vmul.f32 %v1251, %v1210
    %v1253 = vmul.f32 %v1251, %v1211
    %1256 = vrot.lane.b32.xlu0 %v1252, 127
    %v1257 = vpop.permute.xlu0 %1256
    %1258 = vrot.lane.b32.xlu0 %v1253, 127
    %v1259 = vpop.permute.xlu0 %1258
    %v1262 = vadd.f32 %v1222, %v1257
    %v1263 = vadd.f32 %v1223, %v1259
    %s1264 = sld [smem:[#allocation7 + $0x28]]
    %v1265 = vstv %s1264
    %v1266 = vmul.f32 %v1265, %v1210
    %v1267 = vmul.f32 %v1265, %v1211
    %1270 = vrot.lane.b32.xlu0 %v1266, 127
    %v1271 = vpop.permute.xlu0 %1270
    %1272 = vrot.lane.b32.xlu0 %v1267, 127
    %v1273 = vpop.permute.xlu0 %1272
    %v1276 = vadd.f32 %v1228, %v1271
    %v1277 = vadd.f32 %v1229, %v1273
    %s1278 = sld [smem:[#allocation7 + $0x3a]]
    %v1279 = vstv %s1278
    %v1280 = vmul.f32 %v1279, %v1210
    %v1281 = vmul.f32 %v1279, %v1211
    %1284 = vrot.lane.b32.xlu0 %v1280, 127
    %v1285 = vpop.permute.xlu0 %1284
    %1286 = vrot.lane.b32.xlu0 %v1281, 127
    %v1287 = vpop.permute.xlu0 %1286
    %v1290 = vadd.f32 %v1234, %v1285
    %v1291 = vadd.f32 %v1235, %v1287
    %s1292 = sld [smem:[#allocation7 + $0x5]]
    %v1293 = vstv %s1292
    %v1294 = vmul.f32 %v1293, %v1210
    %v1295 = vmul.f32 %v1293, %v1211
    %1298 = vrot.lane.b32.xlu0 %v1294, 126
    %v1299 = vpop.permute.xlu0 %1298
    %1300 = vrot.lane.b32.xlu0 %v1295, 126
    %v1301 = vpop.permute.xlu0 %1300
    %v1304 = vadd.f32 %v1248, %v1299
    %v1305 = vadd.f32 %v1249, %v1301
    %s1306 = sld [smem:[#allocation7 + $0x17]]
    %v1307 = vstv %s1306
    %v1308 = vmul.f32 %v1307, %v1210
    %v1309 = vmul.f32 %v1307, %v1211
    %1312 = vrot.lane.b32.xlu0 %v1308, 126
    %v1313 = vpop.permute.xlu0 %1312
    %1314 = vrot.lane.b32.xlu0 %v1309, 126
    %v1315 = vpop.permute.xlu0 %1314
    %v1318 = vadd.f32 %v1262, %v1313
    %v1319 = vadd.f32 %v1263, %v1315
    %s1320 = sld [smem:[#allocation7 + $0x29]]
    %v1321 = vstv %s1320
    %v1322 = vmul.f32 %v1321, %v1210
    %v1323 = vmul.f32 %v1321, %v1211
    %1326 = vrot.lane.b32.xlu0 %v1322, 126
    %v1327 = vpop.permute.xlu0 %1326
    %1328 = vrot.lane.b32.xlu0 %v1323, 126
    %v1329 = vpop.permute.xlu0 %1328
    %v1332 = vadd.f32 %v1276, %v1327
    %v1333 = vadd.f32 %v1277, %v1329
    %s1334 = sld [smem:[#allocation7 + $0x3b]]
    %v1335 = vstv %s1334
    %v1336 = vmul.f32 %v1335, %v1210
    %v1337 = vmul.f32 %v1335, %v1211
    %1340 = vrot.lane.b32.xlu0 %v1336, 126
    %v1341 = vpop.permute.xlu0 %1340
    %1342 = vrot.lane.b32.xlu0 %v1337, 126
    %v1343 = vpop.permute.xlu0 %1342
    %v1346 = vadd.f32 %v1290, %v1341
    %v1347 = vadd.f32 %v1291, %v1343
    %v1348 = vld [vmem:[%s1079 + $0x2] sm:$0xff]
    %v1349 = vld [vmem:[%s1079 + $0xa] sm:$0xff]
    %s1350 = sld [smem:[#allocation7 + $0x6]]
    %v1351 = vstv %s1350
    %v1352 = vmul.f32 %v1351, %v1348
    %v1353 = vmul.f32 %v1351, %v1349
    %v1354 = vadd.f32 %v1304, %v1352
    %v1355 = vadd.f32 %v1305, %v1353
    %s1356 = sld [smem:[#allocation7 + $0x18]]
    %v1357 = vstv %s1356
    %v1358 = vmul.f32 %v1357, %v1348
    %v1359 = vmul.f32 %v1357, %v1349
    %v1360 = vadd.f32 %v1318, %v1358
    %v1361 = vadd.f32 %v1319, %v1359
    %s1362 = sld [smem:[#allocation7 + $0x2a]]
    %v1363 = vstv %s1362
    %v1364 = vmul.f32 %v1363, %v1348
    %v1365 = vmul.f32 %v1363, %v1349
    %v1366 = vadd.f32 %v1332, %v1364
    %v1367 = vadd.f32 %v1333, %v1365
    %s1368 = sld [smem:[#allocation7 + $0x3c]]
    %v1369 = vstv %s1368
    %v1370 = vmul.f32 %v1369, %v1348
    %v1371 = vmul.f32 %v1369, %v1349
    %v1372 = vadd.f32 %v1346, %v1370
    %v1373 = vadd.f32 %v1347, %v1371
    %s1374 = sld [smem:[#allocation7 + $0x7]]
    %v1375 = vstv %s1374
    %v1376 = vmul.f32 %v1375, %v1348
    %v1377 = vmul.f32 %v1375, %v1349
    %1380 = vrot.lane.b32.xlu0 %v1376, 127
    %v1381 = vpop.permute.xlu0 %1380
    %1382 = vrot.lane.b32.xlu0 %v1377, 127
    %v1383 = vpop.permute.xlu0 %1382
    %v1386 = vadd.f32 %v1354, %v1381
    %v1387 = vadd.f32 %v1355, %v1383
    %s1388 = sld [smem:[#allocation7 + $0x19]]
    %v1389 = vstv %s1388
    %v1390 = vmul.f32 %v1389, %v1348
    %v1391 = vmul.f32 %v1389, %v1349
    %1394 = vrot.lane.b32.xlu0 %v1390, 127
    %v1395 = vpop.permute.xlu0 %1394
    %1396 = vrot.lane.b32.xlu0 %v1391, 127
    %v1397 = vpop.permute.xlu0 %1396
    %v1400 = vadd.f32 %v1360, %v1395
    %v1401 = vadd.f32 %v1361, %v1397
    %s1402 = sld [smem:[#allocation7 + $0x2b]]
    %v1403 = vstv %s1402
    %v1404 = vmul.f32 %v1403, %v1348
    %v1405 = vmul.f32 %v1403, %v1349
    %1408 = vrot.lane.b32.xlu0 %v1404, 127
    %v1409 = vpop.permute.xlu0 %1408
    %1410 = vrot.lane.b32.xlu0 %v1405, 127
    %v1411 = vpop.permute.xlu0 %1410
    %v1414 = vadd.f32 %v1366, %v1409
    %v1415 = vadd.f32 %v1367, %v1411
    %s1416 = sld [smem:[#allocation7 + $0x3d]]
    %v1417 = vstv %s1416
    %v1418 = vmul.f32 %v1417, %v1348
    %v1419 = vmul.f32 %v1417, %v1349
    %1422 = vrot.lane.b32.xlu0 %v1418, 127
    %v1423 = vpop.permute.xlu0 %1422
    %1424 = vrot.lane.b32.xlu0 %v1419, 127
    %v1425 = vpop.permute.xlu0 %1424
    %v1428 = vadd.f32 %v1372, %v1423
    %v1429 = vadd.f32 %v1373, %v1425
    %s1430 = sld [smem:[#allocation7 + $0x8]]
    %v1431 = vstv %s1430
    %v1432 = vmul.f32 %v1431, %v1348
    %v1433 = vmul.f32 %v1431, %v1349
    %1436 = vrot.lane.b32.xlu0 %v1432, 126
    %v1437 = vpop.permute.xlu0 %1436
    %1438 = vrot.lane.b32.xlu0 %v1433, 126
    %v1439 = vpop.permute.xlu0 %1438
    %v1442 = vadd.f32 %v1386, %v1437
    %v1443 = vadd.f32 %v1387, %v1439
    %s1444 = sld [smem:[#allocation7 + $0x1a]]
    %v1445 = vstv %s1444
    %v1446 = vmul.f32 %v1445, %v1348
    %v1447 = vmul.f32 %v1445, %v1349
    %1450 = vrot.lane.b32.xlu0 %v1446, 126
    %v1451 = vpop.permute.xlu0 %1450
    %1452 = vrot.lane.b32.xlu0 %v1447, 126
    %v1453 = vpop.permute.xlu0 %1452
    %v1456 = vadd.f32 %v1400, %v1451
    %v1457 = vadd.f32 %v1401, %v1453
    %s1458 = sld [smem:[#allocation7 + $0x2c]]
    %v1459 = vstv %s1458
    %v1460 = vmul.f32 %v1459, %v1348
    %v1461 = vmul.f32 %v1459, %v1349
    %1464 = vrot.lane.b32.xlu0 %v1460, 126
    %v1465 = vpop.permute.xlu0 %1464
    %1466 = vrot.lane.b32.xlu0 %v1461, 126
    %v1467 = vpop.permute.xlu0 %1466
    %v1470 = vadd.f32 %v1414, %v1465
    %v1471 = vadd.f32 %v1415, %v1467
    %s1472 = sld [smem:[#allocation7 + $0x3e]]
    %v1473 = vstv %s1472
    %v1474 = vmul.f32 %v1473, %v1348
    %v1475 = vmul.f32 %v1473, %v1349
    %1478 = vrot.lane.b32.xlu0 %v1474, 126
    %v1479 = vpop.permute.xlu0 %1478
    %1480 = vrot.lane.b32.xlu0 %v1475, 126
    %v1481 = vpop.permute.xlu0 %1480
    %v1484 = vadd.f32 %v1428, %v1479
    %v1485 = vadd.f32 %v1429, %v1481
    %s1486 = scalar_lea.vmem [#allocation2], 72
    %v1487 = vld [vmem:[%s1486] sm:$0xff]
    %v1488 = vld [vmem:[%s1486 + $0x8] sm:$0xff]
    %s1489 = sld [smem:[#allocation7 + $0x9]]
    %v1490 = vstv %s1489
    %v1491 = vmul.f32 %v1490, %v1487
    %v1492 = vmul.f32 %v1490, %v1488
    %v1493 = vadd.f32 %v1442, %v1491
    %v1494 = vadd.f32 %v1443, %v1492
    %s1495 = sld [smem:[#allocation7 + $0x1b]]
    %v1496 = vstv %s1495
    %v1497 = vmul.f32 %v1496, %v1487
    %v1498 = vmul.f32 %v1496, %v1488
    %v1499 = vadd.f32 %v1456, %v1497
    %v1500 = vadd.f32 %v1457, %v1498
    %s1501 = sld [smem:[#allocation7 + $0x2d]]
    %v1502 = vstv %s1501
    %v1503 = vmul.f32 %v1502, %v1487
    %v1504 = vmul.f32 %v1502, %v1488
    %v1505 = vadd.f32 %v1470, %v1503
    %v1506 = vadd.f32 %v1471, %v1504
    %s1507 = sld [smem:[#allocation7 + $0x3f]]
    %v1508 = vstv %s1507
    %v1509 = vmul.f32 %v1508, %v1487
    %v1510 = vmul.f32 %v1508, %v1488
    %v1511 = vadd.f32 %v1484, %v1509
    %v1512 = vadd.f32 %v1485, %v1510
    %s1513 = sld [smem:[#allocation7 + $0xa]]
    %v1514 = vstv %s1513
    %v1515 = vmul.f32 %v1514, %v1487
    %v1516 = vmul.f32 %v1514, %v1488
    %1519 = vrot.lane.b32.xlu0 %v1515, 127
    %v1520 = vpop.permute.xlu0 %1519
    %1521 = vrot.lane.b32.xlu0 %v1516, 127
    %v1522 = vpop.permute.xlu0 %1521
    %v1525 = vadd.f32 %v1493, %v1520
    %v1526 = vadd.f32 %v1494, %v1522
    %s1527 = sld [smem:[#allocation7 + $0x1c]]
    %v1528 = vstv %s1527
    %v1529 = vmul.f32 %v1528, %v1487
    %v1530 = vmul.f32 %v1528, %v1488
    %1533 = vrot.lane.b32.xlu0 %v1529, 127
    %v1534 = vpop.permute.xlu0 %1533
    %1535 = vrot.lane.b32.xlu0 %v1530, 127
    %v1536 = vpop.permute.xlu0 %1535
    %v1539 = vadd.f32 %v1499, %v1534
    %v1540 = vadd.f32 %v1500, %v1536
    %s1541 = sld [smem:[#allocation7 + $0x2e]]
    %v1542 = vstv %s1541
    %v1543 = vmul.f32 %v1542, %v1487
    %v1544 = vmul.f32 %v1542, %v1488
    %1547 = vrot.lane.b32.xlu0 %v1543, 127
    %v1548 = vpop.permute.xlu0 %1547
    %1549 = vrot.lane.b32.xlu0 %v1544, 127
    %v1550 = vpop.permute.xlu0 %1549
    %v1553 = vadd.f32 %v1505, %v1548
    %v1554 = vadd.f32 %v1506, %v1550
    %s1555 = sld [smem:[#allocation7 + $0x40]]
    %v1556 = vstv %s1555
    %v1557 = vmul.f32 %v1556, %v1487
    %v1558 = vmul.f32 %v1556, %v1488
    %1561 = vrot.lane.b32.xlu0 %v1557, 127
    %v1562 = vpop.permute.xlu0 %1561
    %1563 = vrot.lane.b32.xlu0 %v1558, 127
    %v1564 = vpop.permute.xlu0 %1563
    %v1567 = vadd.f32 %v1511, %v1562
    %v1568 = vadd.f32 %v1512, %v1564
    %s1569 = sld [smem:[#allocation7 + $0xb]]
    %v1570 = vstv %s1569
    %v1571 = vmul.f32 %v1570, %v1487
    %v1572 = vmul.f32 %v1570, %v1488
    %1575 = vrot.lane.b32.xlu0 %v1571, 126
    %v1576 = vpop.permute.xlu0 %1575
    %1577 = vrot.lane.b32.xlu0 %v1572, 126
    %v1578 = vpop.permute.xlu0 %1577
    %v1581 = vadd.f32 %v1525, %v1576
    %v1582 = vadd.f32 %v1526, %v1578
    %s1583 = sld [smem:[#allocation7 + $0x1d]]
    %v1584 = vstv %s1583
    %v1585 = vmul.f32 %v1584, %v1487
    %v1586 = vmul.f32 %v1584, %v1488
    %1589 = vrot.lane.b32.xlu0 %v1585, 126
    %v1590 = vpop.permute.xlu0 %1589
    %1591 = vrot.lane.b32.xlu0 %v1586, 126
    %v1592 = vpop.permute.xlu0 %1591
    %v1595 = vadd.f32 %v1539, %v1590
    %v1596 = vadd.f32 %v1540, %v1592
    %s1597 = sld [smem:[#allocation7 + $0x2f]]
    %v1598 = vstv %s1597
    %v1599 = vmul.f32 %v1598, %v1487
    %v1600 = vmul.f32 %v1598, %v1488
    %1603 = vrot.lane.b32.xlu0 %v1599, 126
    %v1604 = vpop.permute.xlu0 %1603
    %1605 = vrot.lane.b32.xlu0 %v1600, 126
    %v1606 = vpop.permute.xlu0 %1605
    %v1609 = vadd.f32 %v1553, %v1604
    %v1610 = vadd.f32 %v1554, %v1606
    %s1611 = sld [smem:[#allocation7 + $0x41]]
    %v1612 = vstv %s1611
    %v1613 = vmul.f32 %v1612, %v1487
    %v1614 = vmul.f32 %v1612, %v1488
    %1617 = vrot.lane.b32.xlu0 %v1613, 126
    %v1618 = vpop.permute.xlu0 %1617
    %1619 = vrot.lane.b32.xlu0 %v1614, 126
    %v1620 = vpop.permute.xlu0 %1619
    %v1623 = vadd.f32 %v1567, %v1618
    %v1624 = vadd.f32 %v1568, %v1620
    %v1625 = vld [vmem:[%s1486 + $0x1] sm:$0xff]
    %v1626 = vld [vmem:[%s1486 + $0x9] sm:$0xff]
    %s1627 = sld [smem:[#allocation7 + $0xc]]
    %v1628 = vstv %s1627
    %v1629 = vmul.f32 %v1628, %v1625
    %v1630 = vmul.f32 %v1628, %v1626
    %v1631 = vadd.f32 %v1581, %v1629
    %v1632 = vadd.f32 %v1582, %v1630
    %s1633 = sld [smem:[#allocation7 + $0x1e]]
    %v1634 = vstv %s1633
    %v1635 = vmul.f32 %v1634, %v1625
    %v1636 = vmul.f32 %v1634, %v1626
    %v1637 = vadd.f32 %v1595, %v1635
    %v1638 = vadd.f32 %v1596, %v1636
    %s1639 = sld [smem:[#allocation7 + $0x30]]
    %v1640 = vstv %s1639
    %v1641 = vmul.f32 %v1640, %v1625
    %v1642 = vmul.f32 %v1640, %v1626
    %v1643 = vadd.f32 %v1609, %v1641
    %v1644 = vadd.f32 %v1610, %v1642
    %s1645 = sld [smem:[#allocation7 + $0x42]]
    %v1646 = vstv %s1645
    %v1647 = vmul.f32 %v1646, %v1625
    %v1648 = vmul.f32 %v1646, %v1626
    %v1649 = vadd.f32 %v1623, %v1647
    %v1650 = vadd.f32 %v1624, %v1648
    %s1651 = sld [smem:[#allocation7 + $0xd]]
    %v1652 = vstv %s1651
    %v1653 = vmul.f32 %v1652, %v1625
    %v1654 = vmul.f32 %v1652, %v1626
    %1657 = vrot.lane.b32.xlu0 %v1653, 127
    %v1658 = vpop.permute.xlu0 %1657
    %1659 = vrot.lane.b32.xlu0 %v1654, 127
    %v1660 = vpop.permute.xlu0 %1659
    %v1663 = vadd.f32 %v1631, %v1658
    %v1664 = vadd.f32 %v1632, %v1660
    %s1665 = sld [smem:[#allocation7 + $0x1f]]
    %v1666 = vstv %s1665
    %v1667 = vmul.f32 %v1666, %v1625
    %v1668 = vmul.f32 %v1666, %v1626
    %1671 = vrot.lane.b32.xlu0 %v1667, 127
    %v1672 = vpop.permute.xlu0 %1671
    %1673 = vrot.lane.b32.xlu0 %v1668, 127
    %v1674 = vpop.permute.xlu0 %1673
    %v1677 = vadd.f32 %v1637, %v1672
    %v1678 = vadd.f32 %v1638, %v1674
    %s1679 = sld [smem:[#allocation7 + $0x31]]
    %v1680 = vstv %s1679
    %v1681 = vmul.f32 %v1680, %v1625
    %v1682 = vmul.f32 %v1680, %v1626
    %1685 = vrot.lane.b32.xlu0 %v1681, 127
    %v1686 = vpop.permute.xlu0 %1685
    %1687 = vrot.lane.b32.xlu0 %v1682, 127
    %v1688 = vpop.permute.xlu0 %1687
    %v1691 = vadd.f32 %v1643, %v1686
    %v1692 = vadd.f32 %v1644, %v1688
    %s1693 = sld [smem:[#allocation7 + $0x43]]
    %v1694 = vstv %s1693
    %v1695 = vmul.f32 %v1694, %v1625
    %v1696 = vmul.f32 %v1694, %v1626
    %1699 = vrot.lane.b32.xlu0 %v1695, 127
    %v1700 = vpop.permute.xlu0 %1699
    %1701 = vrot.lane.b32.xlu0 %v1696, 127
    %v1702 = vpop.permute.xlu0 %1701
    %v1705 = vadd.f32 %v1649, %v1700
    %v1706 = vadd.f32 %v1650, %v1702
    %s1707 = sld [smem:[#allocation7 + $0xe]]
    %v1708 = vstv %s1707
    %v1709 = vmul.f32 %v1708, %v1625
    %v1710 = vmul.f32 %v1708, %v1626
    %1713 = vrot.lane.b32.xlu0 %v1709, 126
    %v1714 = vpop.permute.xlu0 %1713
    %1715 = vrot.lane.b32.xlu0 %v1710, 126
    %v1716 = vpop.permute.xlu0 %1715
    %v1719 = vadd.f32 %v1663, %v1714
    %v1720 = vadd.f32 %v1664, %v1716
    %s1721 = sld [smem:[#allocation7 + $0x20]]
    %v1722 = vstv %s1721
    %v1723 = vmul.f32 %v1722, %v1625
    %v1724 = vmul.f32 %v1722, %v1626
    %1727 = vrot.lane.b32.xlu0 %v1723, 126
    %v1728 = vpop.permute.xlu0 %1727
    %1729 = vrot.lane.b32.xlu0 %v1724, 126
    %v1730 = vpop.permute.xlu0 %1729
    %v1733 = vadd.f32 %v1677, %v1728
    %v1734 = vadd.f32 %v1678, %v1730
    %s1735 = sld [smem:[#allocation7 + $0x32]]
    %v1736 = vstv %s1735
    %v1737 = vmul.f32 %v1736, %v1625
    %v1738 = vmul.f32 %v1736, %v1626
    %1741 = vrot.lane.b32.xlu0 %v1737, 126
    %v1742 = vpop.permute.xlu0 %1741
    %1743 = vrot.lane.b32.xlu0 %v1738, 126
    %v1744 = vpop.permute.xlu0 %1743
    %v1747 = vadd.f32 %v1691, %v1742
    %v1748 = vadd.f32 %v1692, %v1744
    %s1749 = sld [smem:[#allocation7 + $0x44]]
    %v1750 = vstv %s1749
    %v1751 = vmul.f32 %v1750, %v1625
    %v1752 = vmul.f32 %v1750, %v1626
    %1755 = vrot.lane.b32.xlu0 %v1751, 126
    %v1756 = vpop.permute.xlu0 %1755
    %1757 = vrot.lane.b32.xlu0 %v1752, 126
    %v1758 = vpop.permute.xlu0 %1757
    %v1761 = vadd.f32 %v1705, %v1756
    %v1762 = vadd.f32 %v1706, %v1758
    %v1763 = vld [vmem:[%s1486 + $0x2] sm:$0xff]
    %v1764 = vld [vmem:[%s1486 + $0xa] sm:$0xff]
    %s1765 = sld [smem:[#allocation7 + $0xf]]
    %v1766 = vstv %s1765
    %v1767 = vmul.f32 %v1766, %v1763
    %v1768 = vmul.f32 %v1766, %v1764
    %v1769 = vadd.f32 %v1719, %v1767
    %v1770 = vadd.f32 %v1720, %v1768
    %s1771 = sld [smem:[#allocation7 + $0x21]]
    %v1772 = vstv %s1771
    %v1773 = vmul.f32 %v1772, %v1763
    %v1774 = vmul.f32 %v1772, %v1764
    %v1775 = vadd.f32 %v1733, %v1773
    %v1776 = vadd.f32 %v1734, %v1774
    %s1777 = sld [smem:[#allocation7 + $0x33]]
    %v1778 = vstv %s1777
    %v1779 = vmul.f32 %v1778, %v1763
    %v1780 = vmul.f32 %v1778, %v1764
    %v1781 = vadd.f32 %v1747, %v1779
    %v1782 = vadd.f32 %v1748, %v1780
    %s1783 = sld [smem:[#allocation7 + $0x45]]
    %v1784 = vstv %s1783
    %v1785 = vmul.f32 %v1784, %v1763
    %v1786 = vmul.f32 %v1784, %v1764
    %v1787 = vadd.f32 %v1761, %v1785
    %v1788 = vadd.f32 %v1762, %v1786
    %s1789 = sld [smem:[#allocation7 + $0x10]]
    %v1790 = vstv %s1789
    %v1791 = vmul.f32 %v1790, %v1763
    %v1792 = vmul.f32 %v1790, %v1764
    %1795 = vrot.lane.b32.xlu0 %v1791, 127
    %v1796 = vpop.permute.xlu0 %1795
    %1797 = vrot.lane.b32.xlu0 %v1792, 127
    %v1798 = vpop.permute.xlu0 %1797
    %v1801 = vadd.f32 %v1769, %v1796
    %v1802 = vadd.f32 %v1770, %v1798
    %s1803 = sld [smem:[#allocation7 + $0x22]]
    %v1804 = vstv %s1803
    %v1805 = vmul.f32 %v1804, %v1763
    %v1806 = vmul.f32 %v1804, %v1764
    %1809 = vrot.lane.b32.xlu0 %v1805, 127
    %v1810 = vpop.permute.xlu0 %1809
    %1811 = vrot.lane.b32.xlu0 %v1806, 127
    %v1812 = vpop.permute.xlu0 %1811
    %v1815 = vadd.f32 %v1775, %v1810
    %v1816 = vadd.f32 %v1776, %v1812
    %s1817 = sld [smem:[#allocation7 + $0x34]]
    %v1818 = vstv %s1817
    %v1819 = vmul.f32 %v1818, %v1763
    %v1820 = vmul.f32 %v1818, %v1764
    %1823 = vrot.lane.b32.xlu0 %v1819, 127
    %v1824 = vpop.permute.xlu0 %1823
    %1825 = vrot.lane.b32.xlu0 %v1820, 127
    %v1826 = vpop.permute.xlu0 %1825
    %v1829 = vadd.f32 %v1781, %v1824
    %v1830 = vadd.f32 %v1782, %v1826
    %s1831 = sld [smem:[#allocation7 + $0x46]]
    %v1832 = vstv %s1831
    %v1833 = vmul.f32 %v1832, %v1763
    %v1834 = vmul.f32 %v1832, %v1764
    %1837 = vrot.lane.b32.xlu0 %v1833, 127
    %v1838 = vpop.permute.xlu0 %1837
    %1839 = vrot.lane.b32.xlu0 %v1834, 127
    %v1840 = vpop.permute.xlu0 %1839
    %v1843 = vadd.f32 %v1787, %v1838
    %v1844 = vadd.f32 %v1788, %v1840
    %s1845 = sld [smem:[#allocation7 + $0x11]]
    %v1846 = vstv %s1845
    %v1847 = vmul.f32 %v1846, %v1763
    %v1848 = vmul.f32 %v1846, %v1764
    %1851 = vrot.lane.b32.xlu0 %v1847, 126
    %v1852 = vpop.permute.xlu0 %1851
    %1853 = vrot.lane.b32.xlu0 %v1848, 126
    %v1854 = vpop.permute.xlu0 %1853
    %v1857 = vadd.f32 %v1801, %v1852
    %v1858 = vadd.f32 %v1802, %v1854
    %s1859 = sld [smem:[#allocation7 + $0x23]]
    %v1860 = vstv %s1859
    %v1861 = vmul.f32 %v1860, %v1763
    %v1862 = vmul.f32 %v1860, %v1764
    %1865 = vrot.lane.b32.xlu0 %v1861, 126
    %v1866 = vpop.permute.xlu0 %1865
    %1867 = vrot.lane.b32.xlu0 %v1862, 126
    %v1868 = vpop.permute.xlu0 %1867
    %v1871 = vadd.f32 %v1815, %v1866
    %v1872 = vadd.f32 %v1816, %v1868
    %s1873 = sld [smem:[#allocation7 + $0x35]]
    %v1874 = vstv %s1873
    %v1875 = vmul.f32 %v1874, %v1763
    %v1876 = vmul.f32 %v1874, %v1764
    %1879 = vrot.lane.b32.xlu0 %v1875, 126
    %v1880 = vpop.permute.xlu0 %1879
    %1881 = vrot.lane.b32.xlu0 %v1876, 126
    %v1882 = vpop.permute.xlu0 %1881
    %v1885 = vadd.f32 %v1829, %v1880
    %v1886 = vadd.f32 %v1830, %v1882
    %s1887 = sld [smem:[#allocation7 + $0x47]]
    %v1888 = vstv %s1887
    %v1889 = vmul.f32 %v1888, %v1763
    %v1890 = vmul.f32 %v1888, %v1764
    %1893 = vrot.lane.b32.xlu0 %v1889, 126
    %v1894 = vpop.permute.xlu0 %1893
    %1895 = vrot.lane.b32.xlu0 %v1890, 126
    %v1896 = vpop.permute.xlu0 %1895
    %v1899 = vadd.f32 %v1843, %v1894
    %v1900 = vadd.f32 %v1844, %v1896
    %s1901 = sld [smem:[#allocation8]]
    %v1902 = vstv %s1901
    %v1903 = vmul.f32 %v1857, %v1902
    %v1904 = vmul.f32 %v1858, %v1902
    %s1905 = sld [smem:[#allocation10]]
    %v1906 = vstv %s1905
    %v1907 = vadd.f32 %v1903, %v1906
    %v1908 = vadd.f32 %v1904, %v1906
    %v1909 = vmax.f32 %v1907, 0.0
    %v1910 = vmax.f32 %v1908, 0.0
    %s1911 = sld [smem:[#allocation8 + $0x1]]
    %v1912 = vstv %s1911
    %v1913 = vmul.f32 %v1871, %v1912
    %v1914 = vmul.f32 %v1872, %v1912
    %s1915 = sld [smem:[#allocation10 + $0x1]]
    %v1916 = vstv %s1915
    %v1917 = vadd.f32 %v1913, %v1916
    %v1918 = vadd.f32 %v1914, %v1916
    %v1919 = vmax.f32 %v1917, 0.0
    %v1920 = vmax.f32 %v1918, 0.0
    %s1921 = sld [smem:[#allocation8 + $0x2]]
    %v1922 = vstv %s1921
    %v1923 = vmul.f32 %v1885, %v1922
    %v1924 = vmul.f32 %v1886, %v1922
    %s1925 = sld [smem:[#allocation10 + $0x2]]
    %v1926 = vstv %s1925
    %v1927 = vadd.f32 %v1923, %v1926
    %v1928 = vadd.f32 %v1924, %v1926
    %v1929 = vmax.f32 %v1927, 0.0
    %v1930 = vmax.f32 %v1928, 0.0
    %s1931 = sld [smem:[#allocation8 + $0x3]]
    %v1932 = vstv %s1931
    %v1933 = vmul.f32 %v1899, %v1932
    %v1934 = vmul.f32 %v1900, %v1932
    %s1935 = sld [smem:[#allocation10 + $0x3]]
    %v1936 = vstv %s1935
    %v1937 = vadd.f32 %v1933, %v1936
    %v1938 = vadd.f32 %v1934, %v1936
    %v1939 = vmax.f32 %v1937, 0.0
    %v1940 = vmax.f32 %v1938, 0.0
    %s1941 = sld [smem:[#allocation11]]
    %v1942 = vstv %s1941
    %v1943 = vmul.f32 %v1909, %v1942
    %v1944 = vmul.f32 %v1910, %v1942
    %s1945 = sld [smem:[#allocation13]]
    %v1946 = vstv %s1945
    %v1947 = vadd.f32 %v1943, %v1946
    %v1948 = vadd.f32 %v1944, %v1946
    %s1949 = sld [smem:[#allocation11 + $0x1]]
    %v1950 = vstv %s1949
    %v1951 = vmul.f32 %v1950, %v1919
    %v1952 = vmul.f32 %v1950, %v1920
    %v1953 = vadd.f32 %v1947, %v1951
    %v1954 = vadd.f32 %v1948, %v1952
    %s1955 = sld [smem:[#allocation11 + $0x2]]
    %v1956 = vstv %s1955
    %v1957 = vmul.f32 %v1956, %v1929
    %v1958 = vmul.f32 %v1956, %v1930
    %v1959 = vadd.f32 %v1953, %v1957
    %v1960 = vadd.f32 %v1954, %v1958
    %s1961 = sld [smem:[#allocation11 + $0x3]]
    %v1962 = vstv %s1961
    %v1963 = vmul.f32 %v1962, %v1939
    %v1964 = vmul.f32 %v1962, %v1940
    %v1965 = vadd.f32 %v1959, %v1963
    %v1966 = vadd.f32 %v1960, %v1964
    %s1967 = scalar_lea.vmem [#allocation14], 32
    %1968 = vst.msk [vmem:[%s1967] sm:$0xff] %vm1047, %v1965
    %1969 = vst.msk [vmem:[%s1967 + $0x8] sm:$0xff] %vm1047, %v1966
    %s1970 = sld [smem:[#allocation11 + $0x4]]
    %v1971 = vstv %s1970
    %v1972 = vmul.f32 %v1909, %v1971
    %v1973 = vmul.f32 %v1910, %v1971
    %s1974 = sld [smem:[#allocation13 + $0x1]]
    %v1975 = vstv %s1974
    %v1976 = vadd.f32 %v1972, %v1975
    %v1977 = vadd.f32 %v1973, %v1975
    %s1978 = sld [smem:[#allocation11 + $0x5]]
    %v1979 = vstv %s1978
    %v1980 = vmul.f32 %v1979, %v1919
    %v1981 = vmul.f32 %v1979, %v1920
    %v1982 = vadd.f32 %v1976, %v1980
    %v1983 = vadd.f32 %v1977, %v1981
    %s1984 = sld [smem:[#allocation11 + $0x6]]
    %v1985 = vstv %s1984
    %v1986 = vmul.f32 %v1985, %v1929
    %v1987 = vmul.f32 %v1985, %v1930
    %v1988 = vadd.f32 %v1982, %v1986
    %v1989 = vadd.f32 %v1983, %v1987
    %s1990 = sld [smem:[#allocation11 + $0x7]]
    %v1991 = vstv %s1990
    %v1992 = vmul.f32 %v1991, %v1939
    %v1993 = vmul.f32 %v1991, %v1940
    %v1994 = vadd.f32 %v1988, %v1992
    %v1995 = vadd.f32 %v1989, %v1993
    %s1996 = scalar_lea.vmem [#allocation14], 48
    %1997 = vst.msk [vmem:[%s1996] sm:$0xff] %vm1047, %v1994
    %1998 = vst.msk [vmem:[%s1996 + $0x8] sm:$0xff] %vm1047, %v1995
    // Predicated region
    $region50: #{tpu_custom_call.1} parent=1 // pred_check
      _
    $region51: #{tpu_custom_call.1} parent=1 // pred_check_branch
      %2000 = sbr.rel (0) target = $region53
    $region52: #{tpu_custom_call.1} parent=1 // pred_region
      %s2002 = ssub.s32 1024, 1024
      %2003 = vsyncadd [#allocation5], %s2002
      %s2004 = sshll.u32 [#allocation14], 4
      %s2005 = int_to_ptr.vmem [resolvable:$true] %s2004
      %2010 = dma.vmem_to_hbm [thread:$0]  %s2005, 1024, %s6, [#allocation5], 128, 128, 8
    $region53: #{tpu_custom_call.1} parent=1 // pred_fallthru
      _
    // Predicated region
    $region54: #{tpu_custom_call.1} parent=1 // pred_check
      _
    $region55: #{tpu_custom_call.1} parent=1 // pred_check_branch
      %2012 = sbr.rel (0) target = $region57
    $region56: #{tpu_custom_call.1} parent=1 // pred_region
      %2013 = dma.done [#allocation5], 1024
    $region57: #{tpu_custom_call.1} parent=1 // pred_fallthru
      _
    %2014 = vsyncpa [#allocation4], 1
    %2015 = vsyncpa [#allocation5], 1
    %2016 = vsyncpa [#allocation6], 1
    %2017 = vsyncpa [#allocation9], 1
    %2018 = vsyncpa [#allocation12], 1

</llo_original>
